<compile_context>
chip_gen: v6e
topology: v6e:2x2x1
jax: 0.10.0
libtpu: 0.0.40
codegen_flags: <defaults>
</compile_context>

<pallas_src>
import jax
import jax.numpy as jnp
from jax.experimental import pallas as pl
from jax.experimental.pallas import tpu as pltpu

# ------------------------------ configuration ------------------------------
NUM_LAYERS = 2
NUM_DIRECTIONS = 1
FEAT_SIZE = (128, 128)          # (cnn feature size, i3d feature size)
FEAT_LEN = 8                    # temporal length T of the features
EMBED = 32                      # embedding_size
HIDDEN = 32                     # hidden_size
ATTN = 32                       # attn_size (bottleneck)
OUTPUT = 64                     # output_size (vocab)
BATCH = 2
EMB_PAD = 128                   # embedding segment padded to a full 128-lane group


# ------------------------------ Pallas kernel ------------------------------
def make_decoder_kernel(L, B, T, H, A, F0, F1):
    F = F0 + F1
    f32 = jnp.float32
    bf16 = jnp.bfloat16

    def kernel(*refs):
        (emb_ref, hid_ref, feats_flat_ref, feats_ref,
         w_hid_ref, b_hid_ref,
         wh_att_ref, wf_att_ref, b_att_ref, v_att_ref) = refs[:10]
        cell_refs = refs[10:10 + 3 * L]
        w_out_ref = refs[10 + 3 * L]
        b_out_ref = refs[11 + 3 * L]
        out_ref = refs[12 + 3 * L]
        hid_out_ref = refs[13 + 3 * L]

        hidden_all = hid_ref[...]                                    # (L,B,H) f32

        # ---------------- get_last_hidden (layer attention) ----------------
        # score = tanh(h . w_hid + b): VPU multiply + lane reduce (no width-1 matmul)
        sc = jnp.tanh(jnp.sum(hidden_all * w_hid_ref[...], axis=-1, keepdims=True)
                      + b_hid_ref[...])                              # (L,B,1)
        sc = sc - jnp.max(sc, axis=0, keepdims=True)
        ex = jnp.exp(sc)
        wgt = ex * pl.reciprocal(jnp.sum(ex, axis=0, keepdims=True), approx=True)
        last_hidden = jnp.sum(hidden_all * wgt, axis=0)              # (B,H) f32

        # ------------- fused temporal attention (cnn + i3d streams) -------------
        q_all = jnp.dot(last_hidden.astype(bf16), wh_att_ref[...],
                        preferred_element_type=f32)                  # (B, 2A)
        e_pre = jnp.dot(feats_flat_ref[...], wf_att_ref[...],        # (B*T,F)x(F,2A)
                        preferred_element_type=f32).reshape(B, T, 2 * A)
        e = jnp.tanh(e_pre + q_all[:, None, :] + b_att_ref[...])     # (B,T,2A) f32
        prod = e * v_att_ref[...]                                    # VPU; v as (1,2A) row
        s_cnn = jnp.sum(prod[:, :, :A], axis=-1, keepdims=True)      # (B,T,1)
        s_i3d = jnp.sum(prod[:, :, A:], axis=-1, keepdims=True)      # (B,T,1)

        def softmax_t(s):                                            # softmax over T
            s = s - jnp.max(s, axis=1, keepdims=True)
            es = jnp.exp(s)
            return es * pl.reciprocal(jnp.sum(es, axis=1, keepdims=True), approx=True)

        a_cnn = softmax_t(s_cnn)                                     # (B,T,1)
        a_i3d = softmax_t(s_i3d)                                     # (B,T,1)
        lane = jax.lax.broadcasted_iota(jnp.int32, (B, T, F), 2)
        w_comb = jnp.where(lane < F0, a_cnn, a_i3d)                  # (B,T,F)
        feats = feats_ref[...].astype(f32)                           # (B,T,F)
        ctx = jnp.sum(w_comb * feats, axis=1)                        # (B,F) = [ctx_cnn|ctx_i3d]

        # ---------------- input_combined, lane-aligned (B, 128 + F) ----------------
        x = jnp.concatenate([emb_ref[...].astype(f32), ctx], axis=1)  # (B, 384)

        # -------- Big_zhuanpan rotation + IndRNN-GRU stack (fused 3-gate matmul) --------
        mid = L // 2
        h_list = []
        for i in range(L):
            src = (i - mid) % L if L > 1 else i                      # rotated layer index
            h_prev = hidden_all[src]                                 # (B,H)
            w_ref, b_ref, u_ref = cell_refs[3 * i:3 * i + 3]
            gates = jnp.dot(x.astype(bf16), w_ref[...],
                            preferred_element_type=f32) + b_ref[...]  # (B,3H)
            u = u_ref[...]                                           # (3,1,H) f32
            r = jax.nn.sigmoid(gates[:, 0 * H:1 * H] + u[0] * h_prev)
            z = jax.nn.sigmoid(gates[:, 1 * H:2 * H] + u[1] * h_prev)
            n = jnp.tanh(gates[:, 2 * H:3 * H] + r * (u[2] * h_prev))
            h_cell = (1.0 - z) * n + z * h_prev                      # (B,H)
            h_list.append(h_cell)
            if i > 3 and i % 3 == 1:                                 # residual schedule from forward()
                x = h_cell + x
            else:
                x = h_cell

        hid_out_ref[...] = jnp.stack(h_list, axis=0)                 # single store

        # ---------------- output projection + log_softmax ----------------
        logits = jnp.dot(x.astype(bf16), w_out_ref[...],
                         preferred_element_type=f32) + b_out_ref[...]  # (B,O)
        shifted = logits - jnp.max(logits, axis=1, keepdims=True)
        out_ref[...] = shifted - jnp.log(jnp.sum(jnp.exp(shifted), axis=1, keepdims=True))

    return kernel


# ------------------------------ wrapper ------------------------------
def indrnn_decoder_pallas(embedded, hidden, feats, params):
    """embedded: (1,B,E), hidden: (L,B,H), feats: (B,T,F0+F1)
       -> (logp (B,O), hidden_current (L,B,H), None)"""
    f32, bf16 = jnp.float32, jnp.bfloat16
    L, B, H = hidden.shape
    T = feats.shape[1]
    F0, F1 = FEAT_SIZE
    A = ATTN
    E = embedded.shape[2]
    O = OUTPUT

    # embedding squeezed + zero-padded to a full 128-lane segment
    emb2d = embedded.reshape(B, E).astype(f32)
    emb_pad = jnp.zeros((B, EMB_PAD), f32).at[:, :E].set(emb2d).astype(bf16)

    # fused attention weights: queries concatenated, feature proj block-diagonal
    wh_att = jnp.concatenate([params['ac_Wh'], params['ai_Wh']], axis=1).astype(bf16)   # (H, 2A)
    wf_att = (jnp.zeros((F0 + F1, 2 * A), f32)
              .at[:F0, :A].set(params['ac_Wf'])
              .at[F0:, A:].set(params['ai_Wf'])).astype(bf16)                           # (F, 2A)
    b_att = jnp.concatenate([params['ac_b'], params['ai_b']], axis=1)                   # (1, 2A) f32
    v_att = jnp.concatenate([params['ac_v'].reshape(1, A),
                             params['ai_v'].reshape(1, A)], axis=1)                     # (1, 2A) f32
    w_hid_row = params['w_hid'].reshape(1, H)                                           # (1, H)  f32

    # fused 3-gate GRU weights; layer-0 rows zero-padded to match the 128-aligned x
    cell_inputs = []
    for i in range(L):
        c = params['cells'][i]
        Wcat = jnp.concatenate([c['W'][0], c['W'][1], c['W'][2]], axis=1)               # (in, 3H)
        bcat = jnp.concatenate([c['b'][0], c['b'][1], c['b'][2]], axis=1)               # (1, 3H)
        if i == 0:
            Wcat = jnp.concatenate(
                [Wcat[:E], jnp.zeros((EMB_PAD - E, 3 * H), f32), Wcat[E:]], axis=0)     # (128+F, 3H)
        cell_inputs += [Wcat.astype(bf16), bcat, c['u']]

    feats_bf16 = feats.astype(bf16)
    inputs = [emb_pad, hidden.astype(f32),
              feats_bf16.reshape(B * T, F0 + F1), feats_bf16,
              w_hid_row, params['b_hid'],
              wh_att, wf_att, b_att, v_att,
              *cell_inputs,
              params['w_out'].astype(bf16), params['b_out']]

    kernel = make_decoder_kernel(L, B, T, H, A, F0, F1)
    vmem = lambda: pl.BlockSpec(memory_space=pltpu.MemorySpace.VMEM)

    out_logp, hidden_current = pl.pallas_call(
        kernel,
        out_shape=(jax.ShapeDtypeStruct((B, O), f32),
                   jax.ShapeDtypeStruct((L, B, H), f32)),
        in_specs=[vmem() for _ in inputs],
        out_specs=(vmem(), vmem()),
        input_output_aliases={1: 1},   # reuse the hidden-state buffer for hidden_current
    )(*inputs)
    return out_logp, hidden_current, None


# ------------------------------ deterministic parameter init ------------------------------
def init_params(key):
    ks = jax.random.split(key, 16)
    ki = iter(ks)

    def w(shape, scale=0.1):
        return (scale * jax.random.normal(next(ki), shape)).astype(jnp.float32)

    p = {}
    p['w_hid'] = w((HIDDEN, 1))
    p['b_hid'] = jnp.zeros((1, 1), jnp.float32)
    p['ac_Wh'] = w((HIDDEN, ATTN))
    p['ac_Wf'] = w((FEAT_SIZE[0], ATTN))
    p['ac_b'] = jnp.zeros((1, ATTN), jnp.float32)
    p['ac_v'] = w((ATTN, 1))
    p['ai_Wh'] = w((HIDDEN, ATTN))
    p['ai_Wf'] = w((FEAT_SIZE[1], ATTN))
    p['ai_b'] = jnp.zeros((1, ATTN), jnp.float32)
    p['ai_v'] = w((ATTN, 1))
    in_sizes = [sum(FEAT_SIZE) + EMBED] + [HIDDEN * NUM_DIRECTIONS] * (NUM_LAYERS - 1)
    cells = []
    for i in range(NUM_LAYERS):
        cells.append(dict(
            W=w((3, in_sizes[i], HIDDEN)),
            b=jnp.zeros((3, 1, HIDDEN), jnp.float32),
            u=jax.random.uniform(next(ki), (3, 1, HIDDEN), jnp.float32, -1.0, 1.0),
        ))
    p['cells'] = cells
    p['w_out'] = w((HIDDEN, OUTPUT))
    p['b_out'] = jnp.zeros((1, OUTPUT), jnp.float32)
    return p


# ------------------------------ pure-JAX reference (for validation) ------------------------------
def reference_forward(embedded, hidden, feats, p):
    HI = jax.lax.Precision.HIGHEST
    L, B, H = hidden.shape
    lh = jnp.transpose(hidden, (1, 0, 2))                               # (B, L, H)
    sc = jnp.tanh(jnp.einsum('blh,ho->blo', lh, p['w_hid'], precision=HI) + p['b_hid'][0, 0])
    wgt = jax.nn.softmax(sc, axis=1)
    last_hidden = jnp.sum(lh * wgt, axis=1)                             # (B, H)

    F0 = FEAT_SIZE[0]
    f_cnn, f_i3d = feats[:, :, :F0], feats[:, :, F0:]

    def attn(f, Wh, Wf, b, v):
        q = jnp.dot(last_hidden, Wh, precision=HI)                      # (B, A)
        e = jnp.tanh(jnp.einsum('btf,fa->bta', f, Wf, precision=HI) + q[:, None, :] + b)
        s = jnp.einsum('bta,ao->bto', e, v, precision=HI)               # (B, T, 1)
        al = jax.nn.softmax(s, axis=1)
        return jnp.sum(al * f, axis=1)                                  # (B, F)

    ctx_cnn = attn(f_cnn, p['ac_Wh'], p['ac_Wf'], p['ac_b'], p['ac_v'])
    ctx_i3d = attn(f_i3d, p['ai_Wh'], p['ai_Wf'], p['ai_b'], p['ai_v'])
    x = jnp.concatenate([embedded[0], ctx_cnn, ctx_i3d], axis=1)

    h_rot = jnp.roll(hidden, L // 2, axis=0) if L > 1 else hidden       # Big_zhuanpan
    hidden_current = []
    for i in range(L):
        c = p['cells'][i]
        h_prev = h_rot[i]
        gr = jnp.dot(x, c['W'][0], precision=HI) + c['b'][0]
        gz = jnp.dot(x, c['W'][1], precision=HI) + c['b'][1]
        gn = jnp.dot(x, c['W'][2], precision=HI) + c['b'][2]
        r = jax.nn.sigmoid(gr + c['u'][0] * h_prev)
        z = jax.nn.sigmoid(gz + c['u'][1] * h_prev)
        n = jnp.tanh(gn + r * (c['u'][2] * h_prev))
        h_cell = (1.0 - z) * n + z * h_prev
        hidden_current.append(h_cell)
        x = h_cell + x if (i > 3 and i % 3 == 1) else h_cell

    logits = jnp.dot(x, p['w_out'], precision=HI) + p['b_out']
    return jax.nn.log_softmax(logits, axis=1), jnp.stack(hidden_current, 0), None


# ------------------------------ main ------------------------------
if __name__ == "__main__":
    key = jax.random.PRNGKey(0)
    kp, ke, kh, kf = jax.random.split(key, 4)
    params = init_params(kp)

    embedded = jax.random.normal(ke, (1, BATCH, EMBED), jnp.float32)
    hidden = jax.random.normal(kh, (NUM_LAYERS * NUM_DIRECTIONS, BATCH, HIDDEN), jnp.float32)
    feats = jax.random.normal(kf, (BATCH, FEAT_LEN, sum(FEAT_SIZE)), jnp.float32)

    # The kernel consumes bf16 weights / features (halves weight DMA). Round those
    # tensors to bf16 once here so the f32 reference uses numerically identical
    # values; the comparison below then isolates kernel error (not quantization).
    q = lambda a: a.astype(jnp.bfloat16).astype(jnp.float32)
    for name in ('ac_Wh', 'ac_Wf', 'ai_Wh', 'ai_Wf', 'w_out'):
        params[name] = q(params[name])
    for c in params['cells']:
        c['W'] = q(c['W'])
    embedded = q(embedded)
    feats = q(feats)

    out_logp, hid_cur, _ = indrnn_decoder_pallas(embedded, hidden, feats, params)
    jax.block_until_ready((out_logp, hid_cur))

    ref_out, ref_hid, _ = reference_forward(embedded, hidden, feats, params)
    assert out_logp.shape == (BATCH, OUTPUT)
    assert hid_cur.shape == (NUM_LAYERS, BATCH, HIDDEN)
    assert bool(jnp.allclose(out_logp, ref_out, atol=5e-2, rtol=5e-2))
    assert bool(jnp.allclose(hid_cur, ref_hid, atol=5e-2, rtol=5e-2))

    print("KERNEL_OK")
</pallas_src>

<mosaic_0001>
module attributes {stable_mosaic.version = 11 : i64} {
  func.func @kernel(%arg0: memref<2x128xbf16, #tpu.memory_space<vmem>>, %arg1: memref<2x2x32xf32, #tpu.memory_space<vmem>>, %arg2: memref<16x256xbf16, #tpu.memory_space<vmem>>, %arg3: memref<2x8x256xbf16, #tpu.memory_space<vmem>>, %arg4: memref<1x32xf32, #tpu.memory_space<vmem>>, %arg5: memref<1x1xf32, #tpu.memory_space<vmem>>, %arg6: memref<32x64xbf16, #tpu.memory_space<vmem>>, %arg7: memref<256x64xbf16, #tpu.memory_space<vmem>>, %arg8: memref<1x64xf32, #tpu.memory_space<vmem>>, %arg9: memref<1x64xf32, #tpu.memory_space<vmem>>, %arg10: memref<384x96xbf16, #tpu.memory_space<vmem>>, %arg11: memref<1x96xf32, #tpu.memory_space<vmem>>, %arg12: memref<3x1x32xf32, #tpu.memory_space<vmem>>, %arg13: memref<32x96xbf16, #tpu.memory_space<vmem>>, %arg14: memref<1x96xf32, #tpu.memory_space<vmem>>, %arg15: memref<3x1x32xf32, #tpu.memory_space<vmem>>, %arg16: memref<32x64xbf16, #tpu.memory_space<vmem>>, %arg17: memref<1x64xf32, #tpu.memory_space<vmem>>, %arg18: memref<2x64xf32, #tpu.memory_space<vmem>>, %arg19: memref<2x2x32xf32, #tpu.memory_space<vmem>>) attributes {dimension_semantics = [], scalar_prefetch = 0 : i64, scratch_operands = 0 : i64, tpu.core_type = #tpu.core_type<tc>} {
    %c0 = arith.constant 0 : index
    %c0_0 = arith.constant 0 : index
    %c0_1 = arith.constant 0 : index
    %0 = vector.load %arg1[%c0, %c0_0, %c0_1] : memref<2x2x32xf32, #tpu.memory_space<vmem>>, vector<2x2x32xf32>
    %c0_2 = arith.constant 0 : index
    %c0_3 = arith.constant 0 : index
    %1 = vector.load %arg4[%c0_2, %c0_3] : memref<1x32xf32, #tpu.memory_space<vmem>>, vector<1x32xf32>
    %2 = vector.shape_cast %1 : vector<1x32xf32> to vector<1x1x32xf32>
    %3 = vector.broadcast %2 : vector<1x1x32xf32> to vector<2x2x32xf32>
    %4 = arith.mulf %0, %3 : vector<2x2x32xf32>
    %cst = arith.constant dense<0.000000e+00> : vector<2x2xf32>
    %5 = vector.multi_reduction <add>, %4, %cst [2] : vector<2x2x32xf32> to vector<2x2xf32>
    %6 = vector.shape_cast %5 : vector<2x2xf32> to vector<2x2x1xf32>
    %c0_4 = arith.constant 0 : index
    %c0_5 = arith.constant 0 : index
    %7 = vector.load %arg5[%c0_4, %c0_5] : memref<1x1xf32, #tpu.memory_space<vmem>>, vector<1x1xf32>
    %8 = vector.shape_cast %7 : vector<1x1xf32> to vector<1x1x1xf32>
    %9 = vector.broadcast %8 : vector<1x1x1xf32> to vector<2x2x1xf32>
    %10 = arith.addf %6, %9 : vector<2x2x1xf32>
    %11 = math.tanh %10 : vector<2x2x1xf32>
    %cst_6 = arith.constant dense<0xFF800000> : vector<2x1xf32>
    %12 = vector.multi_reduction <maximumf>, %11, %cst_6 [0] : vector<2x2x1xf32> to vector<2x1xf32>
    %13 = vector.shape_cast %12 : vector<2x1xf32> to vector<1x2x1xf32>
    %14 = vector.broadcast %13 : vector<1x2x1xf32> to vector<2x2x1xf32>
    %15 = arith.subf %11, %14 : vector<2x2x1xf32>
    %16 = math.exp %15 : vector<2x2x1xf32>
    %cst_7 = arith.constant dense<0.000000e+00> : vector<2x1xf32>
    %17 = vector.multi_reduction <add>, %16, %cst_7 [0] : vector<2x2x1xf32> to vector<2x1xf32>
    %18 = vector.shape_cast %17 : vector<2x1xf32> to vector<1x2x1xf32>
    %19 = tpu.reciprocal %18 {approx = true} : vector<1x2x1xf32> -> vector<1x2x1xf32>
    %20 = vector.broadcast %19 : vector<1x2x1xf32> to vector<2x2x1xf32>
    %21 = arith.mulf %16, %20 : vector<2x2x1xf32>
    %22 = vector.broadcast %21 : vector<2x2x1xf32> to vector<2x2x32xf32>
    %23 = arith.mulf %0, %22 : vector<2x2x32xf32>
    %cst_8 = arith.constant dense<0.000000e+00> : vector<2x32xf32>
    %24 = vector.multi_reduction <add>, %23, %cst_8 [0] : vector<2x2x32xf32> to vector<2x32xf32>
    %25 = arith.truncf %24 : vector<2x32xf32> to vector<2x32xbf16>
    %c0_9 = arith.constant 0 : index
    %c0_10 = arith.constant 0 : index
    %26 = vector.load %arg6[%c0_9, %c0_10] : memref<32x64xbf16, #tpu.memory_space<vmem>>, vector<32x64xbf16>
    %cst_11 = arith.constant dense<0.000000e+00> : vector<2x64xf32>
    %27 = tpu.matmul %25, %26, %cst_11 {dimension_numbers = #tpu.dot_dimension_numbers<[1], [0], [0], [1], [0, 0, 1, 1], [], []>} : vector<2x32xbf16>, vector<32x64xbf16>, vector<2x64xf32> -> vector<2x64xf32>
    %c0_12 = arith.constant 0 : index
    %c0_13 = arith.constant 0 : index
    %28 = vector.load %arg2[%c0_12, %c0_13] : memref<16x256xbf16, #tpu.memory_space<vmem>>, vector<16x256xbf16>
    %c0_14 = arith.constant 0 : index
    %c0_15 = arith.constant 0 : index
    %29 = vector.load %arg7[%c0_14, %c0_15] : memref<256x64xbf16, #tpu.memory_space<vmem>>, vector<256x64xbf16>
    %cst_16 = arith.constant dense<0.000000e+00> : vector<16x64xf32>
    %30 = tpu.matmul %28, %29, %cst_16 {dimension_numbers = #tpu.dot_dimension_numbers<[1], [0], [0], [1], [0, 0, 1, 1], [], []>} : vector<16x256xbf16>, vector<256x64xbf16>, vector<16x64xf32> -> vector<16x64xf32>
    %31 = vector.shape_cast %30 : vector<16x64xf32> to vector<2x8x64xf32>
    %32 = vector.shape_cast %27 : vector<2x64xf32> to vector<2x1x64xf32>
    %33 = vector.broadcast %32 : vector<2x1x64xf32> to vector<2x8x64xf32>
    %34 = arith.addf %31, %33 : vector<2x8x64xf32>
    %c0_17 = arith.constant 0 : index
    %c0_18 = arith.constant 0 : index
    %35 = vector.load %arg8[%c0_17, %c0_18] : memref<1x64xf32, #tpu.memory_space<vmem>>, vector<1x64xf32>
    %36 = vector.shape_cast %35 : vector<1x64xf32> to vector<1x1x64xf32>
    %37 = vector.broadcast %36 : vector<1x1x64xf32> to vector<2x8x64xf32>
    %38 = arith.addf %34, %37 : vector<2x8x64xf32>
    %39 = math.tanh %38 : vector<2x8x64xf32>
    %c0_19 = arith.constant 0 : index
    %c0_20 = arith.constant 0 : index
    %40 = vector.load %arg9[%c0_19, %c0_20] : memref<1x64xf32, #tpu.memory_space<vmem>>, vector<1x64xf32>
    %41 = vector.shape_cast %40 : vector<1x64xf32> to vector<1x1x64xf32>
    %42 = vector.broadcast %41 : vector<1x1x64xf32> to vector<2x8x64xf32>
    %43 = arith.mulf %39, %42 : vector<2x8x64xf32>
    %44 = vector.extract_strided_slice %43 {offsets = [0, 0, 0], sizes = [2, 8, 32], strides = [1, 1, 1]} : vector<2x8x64xf32> to vector<2x8x32xf32>
    %cst_21 = arith.constant dense<0.000000e+00> : vector<2x8xf32>
    %45 = vector.multi_reduction <add>, %44, %cst_21 [2] : vector<2x8x32xf32> to vector<2x8xf32>
    %46 = vector.shape_cast %45 : vector<2x8xf32> to vector<2x8x1xf32>
    %47 = vector.extract_strided_slice %43 {offsets = [0, 0, 32], sizes = [2, 8, 32], strides = [1, 1, 1]} : vector<2x8x64xf32> to vector<2x8x32xf32>
    %cst_22 = arith.constant dense<0.000000e+00> : vector<2x8xf32>
    %48 = vector.multi_reduction <add>, %47, %cst_22 [2] : vector<2x8x32xf32> to vector<2x8xf32>
    %49 = vector.shape_cast %48 : vector<2x8xf32> to vector<2x8x1xf32>
    %cst_23 = arith.constant dense<0xFF800000> : vector<2x1xf32>
    %50 = vector.multi_reduction <maximumf>, %46, %cst_23 [1] : vector<2x8x1xf32> to vector<2x1xf32>
    %51 = vector.shape_cast %50 : vector<2x1xf32> to vector<2x1x1xf32>
    %52 = vector.broadcast %51 : vector<2x1x1xf32> to vector<2x8x1xf32>
    %53 = arith.subf %46, %52 : vector<2x8x1xf32>
    %54 = math.exp %53 : vector<2x8x1xf32>
    %cst_24 = arith.constant dense<0.000000e+00> : vector<2x1xf32>
    %55 = vector.multi_reduction <add>, %54, %cst_24 [1] : vector<2x8x1xf32> to vector<2x1xf32>
    %56 = vector.shape_cast %55 : vector<2x1xf32> to vector<2x1x1xf32>
    %57 = tpu.reciprocal %56 {approx = true} : vector<2x1x1xf32> -> vector<2x1x1xf32>
    %58 = vector.broadcast %57 : vector<2x1x1xf32> to vector<2x8x1xf32>
    %59 = arith.mulf %54, %58 : vector<2x8x1xf32>
    %cst_25 = arith.constant dense<0xFF800000> : vector<2x1xf32>
    %60 = vector.multi_reduction <maximumf>, %49, %cst_25 [1] : vector<2x8x1xf32> to vector<2x1xf32>
    %61 = vector.shape_cast %60 : vector<2x1xf32> to vector<2x1x1xf32>
    %62 = vector.broadcast %61 : vector<2x1x1xf32> to vector<2x8x1xf32>
    %63 = arith.subf %49, %62 : vector<2x8x1xf32>
    %64 = math.exp %63 : vector<2x8x1xf32>
    %cst_26 = arith.constant dense<0.000000e+00> : vector<2x1xf32>
    %65 = vector.multi_reduction <add>, %64, %cst_26 [1] : vector<2x8x1xf32> to vector<2x1xf32>
    %66 = vector.shape_cast %65 : vector<2x1xf32> to vector<2x1x1xf32>
    %67 = tpu.reciprocal %66 {approx = true} : vector<2x1x1xf32> -> vector<2x1x1xf32>
    %68 = vector.broadcast %67 : vector<2x1x1xf32> to vector<2x8x1xf32>
    %69 = arith.mulf %64, %68 : vector<2x8x1xf32>
    %70 = tpu.iota {dimensions = array<i32: 2>} : vector<2x8x256xi32>
    %c128_i32 = arith.constant 128 : i32
    %71 = vector.broadcast %c128_i32 : i32 to vector<2x8x256xi32>
    %72 = arith.cmpi slt, %70, %71 : vector<2x8x256xi32>
    %73 = vector.shape_cast %59 : vector<2x8x1xf32> to vector<2x8x1xf32>
    %74 = vector.broadcast %73 : vector<2x8x1xf32> to vector<2x8x256xf32>
    %75 = vector.shape_cast %69 : vector<2x8x1xf32> to vector<2x8x1xf32>
    %76 = vector.broadcast %75 : vector<2x8x1xf32> to vector<2x8x256xf32>
    %77 = arith.select %72, %74, %76 : vector<2x8x256xi1>, vector<2x8x256xf32>
    %c0_27 = arith.constant 0 : index
    %c0_28 = arith.constant 0 : index
    %c0_29 = arith.constant 0 : index
    %78 = vector.load %arg3[%c0_27, %c0_28, %c0_29] : memref<2x8x256xbf16, #tpu.memory_space<vmem>>, vector<2x8x256xbf16>
    %79 = arith.extf %78 : vector<2x8x256xbf16> to vector<2x8x256xf32>
    %80 = arith.mulf %77, %79 : vector<2x8x256xf32>
    %cst_30 = arith.constant dense<0.000000e+00> : vector<2x256xf32>
    %81 = vector.multi_reduction <add>, %80, %cst_30 [1] : vector<2x8x256xf32> to vector<2x256xf32>
    %c0_31 = arith.constant 0 : index
    %c0_32 = arith.constant 0 : index
    %82 = vector.load %arg0[%c0_31, %c0_32] : memref<2x128xbf16, #tpu.memory_space<vmem>>, vector<2x128xbf16>
    %83 = arith.extf %82 : vector<2x128xbf16> to vector<2x128xf32>
    %84 = tpu.concatenate %83, %81 in 1 : vector<2x128xf32>, vector<2x256xf32> -> vector<2x384xf32>
    %85 = vector.extract_strided_slice %0 {offsets = [1, 0, 0], sizes = [1, 2, 32], strides = [1, 1, 1]} : vector<2x2x32xf32> to vector<1x2x32xf32>
    %86 = vector.shape_cast %85 : vector<1x2x32xf32> to vector<2x32xf32>
    %87 = arith.truncf %84 : vector<2x384xf32> to vector<2x384xbf16>
    %c0_33 = arith.constant 0 : index
    %c0_34 = arith.constant 0 : index
    %88 = vector.load %arg10[%c0_33, %c0_34] : memref<384x96xbf16, #tpu.memory_space<vmem>>, vector<384x96xbf16>
    %cst_35 = arith.constant dense<0.000000e+00> : vector<2x96xf32>
    %89 = tpu.matmul %87, %88, %cst_35 {dimension_numbers = #tpu.dot_dimension_numbers<[1], [0], [0], [1], [0, 0, 1, 1], [], []>} : vector<2x384xbf16>, vector<384x96xbf16>, vector<2x96xf32> -> vector<2x96xf32>
    %c0_36 = arith.constant 0 : index
    %c0_37 = arith.constant 0 : index
    %90 = vector.load %arg11[%c0_36, %c0_37] : memref<1x96xf32, #tpu.memory_space<vmem>>, vector<1x96xf32>
    %91 = vector.broadcast %90 : vector<1x96xf32> to vector<2x96xf32>
    %92 = arith.addf %89, %91 : vector<2x96xf32>
    %c0_38 = arith.constant 0 : index
    %c0_39 = arith.constant 0 : index
    %c0_40 = arith.constant 0 : index
    %93 = vector.load %arg12[%c0_38, %c0_39, %c0_40] : memref<3x1x32xf32, #tpu.memory_space<vmem>>, vector<3x1x32xf32>
    %94 = vector.extract_strided_slice %92 {offsets = [0, 0], sizes = [2, 32], strides = [1, 1]} : vector<2x96xf32> to vector<2x32xf32>
    %95 = vector.extract_strided_slice %93 {offsets = [0, 0, 0], sizes = [1, 1, 32], strides = [1, 1, 1]} : vector<3x1x32xf32> to vector<1x1x32xf32>
    %96 = vector.shape_cast %95 : vector<1x1x32xf32> to vector<1x32xf32>
    %97 = vector.broadcast %96 : vector<1x32xf32> to vector<2x32xf32>
    %98 = arith.mulf %97, %86 : vector<2x32xf32>
    %99 = arith.addf %94, %98 : vector<2x32xf32>
    %100 = arith.negf %99 : vector<2x32xf32>
    %101 = math.exp %100 : vector<2x32xf32>
    %cst_41 = arith.constant 1.000000e+00 : f32
    %102 = vector.broadcast %cst_41 : f32 to vector<2x32xf32>
    %103 = arith.addf %102, %101 : vector<2x32xf32>
    %104 = arith.divf %102, %103 : vector<2x32xf32>
    %105 = vector.extract_strided_slice %92 {offsets = [0, 32], sizes = [2, 32], strides = [1, 1]} : vector<2x96xf32> to vector<2x32xf32>
    %106 = vector.extract_strided_slice %93 {offsets = [1, 0, 0], sizes = [1, 1, 32], strides = [1, 1, 1]} : vector<3x1x32xf32> to vector<1x1x32xf32>
    %107 = vector.shape_cast %106 : vector<1x1x32xf32> to vector<1x32xf32>
    %108 = vector.broadcast %107 : vector<1x32xf32> to vector<2x32xf32>
    %109 = arith.mulf %108, %86 : vector<2x32xf32>
    %110 = arith.addf %105, %109 : vector<2x32xf32>
    %111 = arith.negf %110 : vector<2x32xf32>
    %112 = math.exp %111 : vector<2x32xf32>
    %cst_42 = arith.constant 1.000000e+00 : f32
    %113 = vector.broadcast %cst_42 : f32 to vector<2x32xf32>
    %114 = arith.addf %113, %112 : vector<2x32xf32>
    %115 = arith.divf %113, %114 : vector<2x32xf32>
    %116 = vector.extract_strided_slice %92 {offsets = [0, 64], sizes = [2, 32], strides = [1, 1]} : vector<2x96xf32> to vector<2x32xf32>
    %117 = vector.extract_strided_slice %93 {offsets = [2, 0, 0], sizes = [1, 1, 32], strides = [1, 1, 1]} : vector<3x1x32xf32> to vector<1x1x32xf32>
    %118 = vector.shape_cast %117 : vector<1x1x32xf32> to vector<1x32xf32>
    %119 = vector.broadcast %118 : vector<1x32xf32> to vector<2x32xf32>
    %120 = arith.mulf %119, %86 : vector<2x32xf32>
    %121 = arith.mulf %104, %120 : vector<2x32xf32>
    %122 = arith.addf %116, %121 : vector<2x32xf32>
    %123 = math.tanh %122 : vector<2x32xf32>
    %cst_43 = arith.constant 1.000000e+00 : f32
    %124 = vector.broadcast %cst_43 : f32 to vector<2x32xf32>
    %125 = arith.subf %124, %115 : vector<2x32xf32>
    %126 = arith.mulf %125, %123 : vector<2x32xf32>
    %127 = arith.mulf %115, %86 : vector<2x32xf32>
    %128 = arith.addf %126, %127 : vector<2x32xf32>
    %129 = vector.extract_strided_slice %0 {offsets = [0, 0, 0], sizes = [1, 2, 32], strides = [1, 1, 1]} : vector<2x2x32xf32> to vector<1x2x32xf32>
    %130 = vector.shape_cast %129 : vector<1x2x32xf32> to vector<2x32xf32>
    %131 = arith.truncf %128 : vector<2x32xf32> to vector<2x32xbf16>
    %c0_44 = arith.constant 0 : index
    %c0_45 = arith.constant 0 : index
    %132 = vector.load %arg13[%c0_44, %c0_45] : memref<32x96xbf16, #tpu.memory_space<vmem>>, vector<32x96xbf16>
    %cst_46 = arith.constant dense<0.000000e+00> : vector<2x96xf32>
    %133 = tpu.matmul %131, %132, %cst_46 {dimension_numbers = #tpu.dot_dimension_numbers<[1], [0], [0], [1], [0, 0, 1, 1], [], []>} : vector<2x32xbf16>, vector<32x96xbf16>, vector<2x96xf32> -> vector<2x96xf32>
    %c0_47 = arith.constant 0 : index
    %c0_48 = arith.constant 0 : index
    %134 = vector.load %arg14[%c0_47, %c0_48] : memref<1x96xf32, #tpu.memory_space<vmem>>, vector<1x96xf32>
    %135 = vector.broadcast %134 : vector<1x96xf32> to vector<2x96xf32>
    %136 = arith.addf %133, %135 : vector<2x96xf32>
    %c0_49 = arith.constant 0 : index
    %c0_50 = arith.constant 0 : index
    %c0_51 = arith.constant 0 : index
    %137 = vector.load %arg15[%c0_49, %c0_50, %c0_51] : memref<3x1x32xf32, #tpu.memory_space<vmem>>, vector<3x1x32xf32>
    %138 = vector.extract_strided_slice %136 {offsets = [0, 0], sizes = [2, 32], strides = [1, 1]} : vector<2x96xf32> to vector<2x32xf32>
    %139 = vector.extract_strided_slice %137 {offsets = [0, 0, 0], sizes = [1, 1, 32], strides = [1, 1, 1]} : vector<3x1x32xf32> to vector<1x1x32xf32>
    %140 = vector.shape_cast %139 : vector<1x1x32xf32> to vector<1x32xf32>
    %141 = vector.broadcast %140 : vector<1x32xf32> to vector<2x32xf32>
    %142 = arith.mulf %141, %130 : vector<2x32xf32>
    %143 = arith.addf %138, %142 : vector<2x32xf32>
    %144 = arith.negf %143 : vector<2x32xf32>
    %145 = math.exp %144 : vector<2x32xf32>
    %cst_52 = arith.constant 1.000000e+00 : f32
    %146 = vector.broadcast %cst_52 : f32 to vector<2x32xf32>
    %147 = arith.addf %146, %145 : vector<2x32xf32>
    %148 = arith.divf %146, %147 : vector<2x32xf32>
    %149 = vector.extract_strided_slice %136 {offsets = [0, 32], sizes = [2, 32], strides = [1, 1]} : vector<2x96xf32> to vector<2x32xf32>
    %150 = vector.extract_strided_slice %137 {offsets = [1, 0, 0], sizes = [1, 1, 32], strides = [1, 1, 1]} : vector<3x1x32xf32> to vector<1x1x32xf32>
    %151 = vector.shape_cast %150 : vector<1x1x32xf32> to vector<1x32xf32>
    %152 = vector.broadcast %151 : vector<1x32xf32> to vector<2x32xf32>
    %153 = arith.mulf %152, %130 : vector<2x32xf32>
    %154 = arith.addf %149, %153 : vector<2x32xf32>
    %155 = arith.negf %154 : vector<2x32xf32>
    %156 = math.exp %155 : vector<2x32xf32>
    %cst_53 = arith.constant 1.000000e+00 : f32
    %157 = vector.broadcast %cst_53 : f32 to vector<2x32xf32>
    %158 = arith.addf %157, %156 : vector<2x32xf32>
    %159 = arith.divf %157, %158 : vector<2x32xf32>
    %160 = vector.extract_strided_slice %136 {offsets = [0, 64], sizes = [2, 32], strides = [1, 1]} : vector<2x96xf32> to vector<2x32xf32>
    %161 = vector.extract_strided_slice %137 {offsets = [2, 0, 0], sizes = [1, 1, 32], strides = [1, 1, 1]} : vector<3x1x32xf32> to vector<1x1x32xf32>
    %162 = vector.shape_cast %161 : vector<1x1x32xf32> to vector<1x32xf32>
    %163 = vector.broadcast %162 : vector<1x32xf32> to vector<2x32xf32>
    %164 = arith.mulf %163, %130 : vector<2x32xf32>
    %165 = arith.mulf %148, %164 : vector<2x32xf32>
    %166 = arith.addf %160, %165 : vector<2x32xf32>
    %167 = math.tanh %166 : vector<2x32xf32>
    %cst_54 = arith.constant 1.000000e+00 : f32
    %168 = vector.broadcast %cst_54 : f32 to vector<2x32xf32>
    %169 = arith.subf %168, %159 : vector<2x32xf32>
    %170 = arith.mulf %169, %167 : vector<2x32xf32>
    %171 = arith.mulf %159, %130 : vector<2x32xf32>
    %172 = arith.addf %170, %171 : vector<2x32xf32>
    %173 = vector.shape_cast %128 : vector<2x32xf32> to vector<1x2x32xf32>
    %174 = vector.shape_cast %172 : vector<2x32xf32> to vector<1x2x32xf32>
    %175 = tpu.concatenate %173, %174 in 0 : vector<1x2x32xf32>, vector<1x2x32xf32> -> vector<2x2x32xf32>
    %c0_55 = arith.constant 0 : index
    %c0_56 = arith.constant 0 : index
    %c0_57 = arith.constant 0 : index
    %176 = vector.load %arg19[%c0_55, %c0_56, %c0_57] : memref<2x2x32xf32, #tpu.memory_space<vmem>>, vector<2x2x32xf32>
    tpu.vector_store %arg19[%c0_55, %c0_56, %c0_57], %175 {strides = array<i32>} : memref<2x2x32xf32, #tpu.memory_space<vmem>>, vector<2x2x32xf32>,
    %177 = arith.truncf %172 : vector<2x32xf32> to vector<2x32xbf16>
    %c0_58 = arith.constant 0 : index
    %c0_59 = arith.constant 0 : index
    %178 = vector.load %arg16[%c0_58, %c0_59] : memref<32x64xbf16, #tpu.memory_space<vmem>>, vector<32x64xbf16>
    %cst_60 = arith.constant dense<0.000000e+00> : vector<2x64xf32>
    %179 = tpu.matmul %177, %178, %cst_60 {dimension_numbers = #tpu.dot_dimension_numbers<[1], [0], [0], [1], [0, 0, 1, 1], [], []>} : vector<2x32xbf16>, vector<32x64xbf16>, vector<2x64xf32> -> vector<2x64xf32>
    %c0_61 = arith.constant 0 : index
    %c0_62 = arith.constant 0 : index
    %180 = vector.load %arg17[%c0_61, %c0_62] : memref<1x64xf32, #tpu.memory_space<vmem>>, vector<1x64xf32>
    %181 = vector.broadcast %180 : vector<1x64xf32> to vector<2x64xf32>
    %182 = arith.addf %179, %181 : vector<2x64xf32>
    %cst_63 = arith.constant dense<0xFF800000> : vector<2xf32>
    %183 = vector.multi_reduction <maximumf>, %182, %cst_63 [1] : vector<2x64xf32> to vector<2xf32>
    %184 = vector.shape_cast %183 : vector<2xf32> to vector<2x1xf32>
    %185 = vector.broadcast %184 : vector<2x1xf32> to vector<2x64xf32>
    %186 = arith.subf %182, %185 : vector<2x64xf32>
    %187 = math.exp %186 : vector<2x64xf32>
    %cst_64 = arith.constant dense<0.000000e+00> : vector<2xf32>
    %188 = vector.multi_reduction <add>, %187, %cst_64 [1] : vector<2x64xf32> to vector<2xf32>
    %189 = vector.shape_cast %188 : vector<2xf32> to vector<2x1xf32>
    %190 = math.log %189 : vector<2x1xf32>
    %191 = vector.broadcast %190 : vector<2x1xf32> to vector<2x64xf32>
    %192 = arith.subf %186, %191 : vector<2x64xf32>
    %c0_65 = arith.constant 0 : index
    %c0_66 = arith.constant 0 : index
    %193 = vector.load %arg18[%c0_65, %c0_66] : memref<2x64xf32, #tpu.memory_space<vmem>>, vector<2x64xf32>
    tpu.vector_store %arg18[%c0_65, %c0_66], %192 {strides = array<i32>} : memref<2x64xf32, #tpu.memory_space<vmem>>, vector<2x64xf32>,
    return
  }
}

</mosaic_0001>

<llo_original>
// kernel: tpu_custom_call.1
$region0: #{tpu_custom_call.1}
  #allocation0 [shape = 'u32[]', space=smem, size = 0x4, offset = 0x4, fixed_abs, tag = 'smem constant byte address 0x4 - core index']
  #allocation1 [shape = 'u32[144,128]{1,0:T(1,128)}', space=vmem, size = 0x12000, scoped, tag = 'internal scratch']
  #allocation2 [shape = 'f32[1,1]{1,0:T(1,128)S(1)}', space=vmem, size = 0x200, scoped, tag = 'scoped memory for tpu_custom_call.1']
  %s0 = inlined_call_operand.vmem [shape: bf16[2,128], index: 0, kind: input, shape index: {}]
  %s1 = inlined_call_operand.hbm [shape: f32[2,2,32], index: 1, kind: input, shape index: {}, may-alias: {1,19}]
  %s2 = inlined_call_operand.vmem [shape: bf16[16,256], index: 2, kind: input, shape index: {}]
  %s3 = inlined_call_operand.vmem [shape: bf16[2,8,256], index: 3, kind: input, shape index: {}]
  %s4 = inlined_call_operand.vmem [shape: f32[1,32], index: 4, kind: input, shape index: {}]
  %s5 = inlined_call_operand.<no memory space> [shape: f32[1,1], index: 5, kind: input, shape index: {}]
  %s6 = inlined_call_operand.vmem [shape: bf16[32,64], index: 6, kind: input, shape index: {}]
  %s7 = inlined_call_operand.vmem [shape: bf16[256,64], index: 7, kind: input, shape index: {}]
  %s8 = inlined_call_operand.vmem [shape: f32[1,64], index: 8, kind: input, shape index: {}]
  %s9 = inlined_call_operand.vmem [shape: f32[1,64], index: 9, kind: input, shape index: {}]
  %s10 = inlined_call_operand.vmem [shape: bf16[384,96], index: 10, kind: input, shape index: {}]
  %s11 = inlined_call_operand.vmem [shape: f32[1,96], index: 11, kind: input, shape index: {}]
  %s12 = inlined_call_operand.vmem [shape: f32[3,1,32], index: 12, kind: input, shape index: {}]
  %s13 = inlined_call_operand.vmem [shape: bf16[32,96], index: 13, kind: input, shape index: {}]
  %s14 = inlined_call_operand.vmem [shape: f32[1,96], index: 14, kind: input, shape index: {}]
  %s15 = inlined_call_operand.vmem [shape: f32[3,1,32], index: 15, kind: input, shape index: {}]
  %s16 = inlined_call_operand.vmem [shape: bf16[32,64], index: 16, kind: input, shape index: {}]
  %s17 = inlined_call_operand.vmem [shape: f32[1,64], index: 17, kind: input, shape index: {}]
  %s18 = inlined_call_operand.hbm [shape: f32[2,64], index: 18, kind: output, shape index: {0}]
  %s19 = inlined_call_operand.hbm [shape: f32[2,2,32], index: 19, kind: output, shape index: {1}, may-alias: {1,19}]
  %20 = xla_tuple %s18, %s19
  %s21 = sld [smem:[#allocation0]]
  $region94: #{tpu_custom_call.1} parent=0
    _
  %s23 = ssub.s32 1, %s21
  %s24 = scalar_select 0, %s23, %s21
  %v25 = vstv %s5
  %26 = vst [vmem:[#allocation2] sm:$0x1] %v25
  $region1: #{tpu_custom_call.1} parent=0
    #allocation3 [shape = 'u8[2048]{0}', space=vmem, size = 0x800, scoped, tag = 'input window, operand 1, single buffered']
    #allocation4 [shape = 's32[1]{0}', space=sflag, size = 0x4, scoped, tag = 'scoped memory for tpu_custom_call.1']
    #allocation5 [shape = 's32[1]{0}', space=sflag, size = 0x4, scoped, tag = 'scoped memory for tpu_custom_call.1']
    #allocation6 [shape = 'u8[1024]{0}', space=vmem, size = 0x400, scoped, tag = 'output window, operand 0, single buffered']
    #allocation7 [shape = 'u8[2048]{0}', space=vmem, size = 0x800, scoped, tag = 'output window, operand 1, single buffered']
    #allocation8 [shape = 's32[1]{0}', space=sflag, size = 0x4, scoped, tag = 'scoped memory for tpu_custom_call.1']
    %27 = vsyncpa [#allocation4], 0
    %28 = vsyncpa [#allocation5], 0
    %29 = vsyncpa [#allocation8], 0
    // Predicated region
    $region2: #{tpu_custom_call.1} parent=1 // pred_check
      _
    $region3: #{tpu_custom_call.1} parent=1 // pred_check_branch
      %31 = sbr.rel (0) target = $region5
    $region4: #{tpu_custom_call.1} parent=1 // pred_region
      _
    $region5: #{tpu_custom_call.1} parent=1 // pred_fallthru
      _
    // Predicated region
    $region6: #{tpu_custom_call.1} parent=1 // pred_check
      _
    $region7: #{tpu_custom_call.1} parent=1 // pred_check_branch
      %33 = sbr.rel (0) target = $region9
    $region8: #{tpu_custom_call.1} parent=1 // pred_region
      %s35 = ssub.s32 64, 64
      %36 = vsyncadd [#allocation4], %s35
      %s37 = sshll.u32 [#allocation3], 4
      %s38 = int_to_ptr.vmem [resolvable:$true] %s37
      %43 = dma.hbm_to_vmem [thread:$0]  %s1, 64, %s38, [#allocation4], 32, 32, 2
    $region9: #{tpu_custom_call.1} parent=1 // pred_fallthru
      _
    // Predicated region
    $region10: #{tpu_custom_call.1} parent=1 // pred_check
      _
    $region11: #{tpu_custom_call.1} parent=1 // pred_check_branch
      %45 = sbr.rel (0) target = $region13
    $region12: #{tpu_custom_call.1} parent=1 // pred_region
      _
    $region13: #{tpu_custom_call.1} parent=1 // pred_fallthru
      _
    // Predicated region
    $region14: #{tpu_custom_call.1} parent=1 // pred_check
      _
    $region15: #{tpu_custom_call.1} parent=1 // pred_check_branch
      %47 = sbr.rel (0) target = $region17
    $region16: #{tpu_custom_call.1} parent=1 // pred_region
      _
    $region17: #{tpu_custom_call.1} parent=1 // pred_fallthru
      _
    // Predicated region
    $region18: #{tpu_custom_call.1} parent=1 // pred_check
      _
    $region19: #{tpu_custom_call.1} parent=1 // pred_check_branch
      %49 = sbr.rel (0) target = $region21
    $region20: #{tpu_custom_call.1} parent=1 // pred_region
      _
    $region21: #{tpu_custom_call.1} parent=1 // pred_fallthru
      _
    // Predicated region
    $region22: #{tpu_custom_call.1} parent=1 // pred_check
      _
    $region23: #{tpu_custom_call.1} parent=1 // pred_check_branch
      %51 = sbr.rel (0) target = $region25
    $region24: #{tpu_custom_call.1} parent=1 // pred_region
      _
    $region25: #{tpu_custom_call.1} parent=1 // pred_fallthru
      _
    // Predicated region
    $region26: #{tpu_custom_call.1} parent=1 // pred_check
      _
    $region27: #{tpu_custom_call.1} parent=1 // pred_check_branch
      %53 = sbr.rel (0) target = $region29
    $region28: #{tpu_custom_call.1} parent=1 // pred_region
      _
    $region29: #{tpu_custom_call.1} parent=1 // pred_fallthru
      _
    // Predicated region
    $region30: #{tpu_custom_call.1} parent=1 // pred_check
      _
    $region31: #{tpu_custom_call.1} parent=1 // pred_check_branch
      %55 = sbr.rel (0) target = $region33
    $region32: #{tpu_custom_call.1} parent=1 // pred_region
      _
    $region33: #{tpu_custom_call.1} parent=1 // pred_fallthru
      _
    // Predicated region
    $region34: #{tpu_custom_call.1} parent=1 // pred_check
      _
    $region35: #{tpu_custom_call.1} parent=1 // pred_check_branch
      %57 = sbr.rel (0) target = $region37
    $region36: #{tpu_custom_call.1} parent=1 // pred_region
      _
    $region37: #{tpu_custom_call.1} parent=1 // pred_fallthru
      _
    // Predicated region
    $region38: #{tpu_custom_call.1} parent=1 // pred_check
      _
    $region39: #{tpu_custom_call.1} parent=1 // pred_check_branch
      %59 = sbr.rel (0) target = $region41
    $region40: #{tpu_custom_call.1} parent=1 // pred_region
      _
    $region41: #{tpu_custom_call.1} parent=1 // pred_fallthru
      _
    // Predicated region
    $region42: #{tpu_custom_call.1} parent=1 // pred_check
      _
    $region43: #{tpu_custom_call.1} parent=1 // pred_check_branch
      %61 = sbr.rel (0) target = $region45
    $region44: #{tpu_custom_call.1} parent=1 // pred_region
      _
    $region45: #{tpu_custom_call.1} parent=1 // pred_fallthru
      _
    // Predicated region
    $region46: #{tpu_custom_call.1} parent=1 // pred_check
      _
    $region47: #{tpu_custom_call.1} parent=1 // pred_check_branch
      %63 = sbr.rel (0) target = $region49
    $region48: #{tpu_custom_call.1} parent=1 // pred_region
      _
    $region49: #{tpu_custom_call.1} parent=1 // pred_fallthru
      _
    // Predicated region
    $region50: #{tpu_custom_call.1} parent=1 // pred_check
      _
    $region51: #{tpu_custom_call.1} parent=1 // pred_check_branch
      %65 = sbr.rel (0) target = $region53
    $region52: #{tpu_custom_call.1} parent=1 // pred_region
      _
    $region53: #{tpu_custom_call.1} parent=1 // pred_fallthru
      _
    // Predicated region
    $region54: #{tpu_custom_call.1} parent=1 // pred_check
      _
    $region55: #{tpu_custom_call.1} parent=1 // pred_check_branch
      %67 = sbr.rel (0) target = $region57
    $region56: #{tpu_custom_call.1} parent=1 // pred_region
      _
    $region57: #{tpu_custom_call.1} parent=1 // pred_fallthru
      _
    // Predicated region
    $region58: #{tpu_custom_call.1} parent=1 // pred_check
      _
    $region59: #{tpu_custom_call.1} parent=1 // pred_check_branch
      %69 = sbr.rel (0) target = $region61
    $region60: #{tpu_custom_call.1} parent=1 // pred_region
      _
    $region61: #{tpu_custom_call.1} parent=1 // pred_fallthru
      _
    // Predicated region
    $region62: #{tpu_custom_call.1} parent=1 // pred_check
      _
    $region63: #{tpu_custom_call.1} parent=1 // pred_check_branch
      %71 = sbr.rel (0) target = $region65
    $region64: #{tpu_custom_call.1} parent=1 // pred_region
      _
    $region65: #{tpu_custom_call.1} parent=1 // pred_fallthru
      _
    // Predicated region
    $region66: #{tpu_custom_call.1} parent=1 // pred_check
      _
    $region67: #{tpu_custom_call.1} parent=1 // pred_check_branch
      %73 = sbr.rel (0) target = $region69
    $region68: #{tpu_custom_call.1} parent=1 // pred_region
      _
    $region69: #{tpu_custom_call.1} parent=1 // pred_fallthru
      _
    // Predicated region
    $region70: #{tpu_custom_call.1} parent=1 // pred_check
      _
    $region71: #{tpu_custom_call.1} parent=1 // pred_check_branch
      %75 = sbr.rel (0) target = $region73
    $region72: #{tpu_custom_call.1} parent=1 // pred_region
      _
    $region73: #{tpu_custom_call.1} parent=1 // pred_fallthru
      _
    // Predicated region
    $region74: #{tpu_custom_call.1} parent=1 // pred_check
      _
    $region75: #{tpu_custom_call.1} parent=1 // pred_check_branch
      %77 = sbr.rel (0) target = $region77
    $region76: #{tpu_custom_call.1} parent=1 // pred_region
      %78 = dma.done [#allocation4], 64
    $region77: #{tpu_custom_call.1} parent=1 // pred_fallthru
      _
    %v80 = vld [vmem:[#allocation3] sm:$0x3]
    %v81 = vld [vmem:[#allocation3 + $0x2] sm:$0x3]
    %v82 = vld [vmem:[%s4] sm:$0x1]
    %v84 = vlaneseq
    %v85 = vshrl.u32 %v84, 7
    %v86 = vsub.s32 0, %v85
    %v87 = vrot.slane %v82, %v86
    %v89 = vmul.f32 %v80, %v87
    %v90 = vmul.f32 %v81, %v87
    %vm91 = vcmask 254976
    %v92 = vsel %vm91, %v89, 0.0
    %93 = vadd.xlane.f32.xlu0 %v92
    %v94 = vpop.xlane.xlu0 %93
    %v95 = vsel %vm91, %v90, 0.0
    %96 = vadd.xlane.f32.xlu0 %v95
    %v97 = vpop.xlane.xlu0 %96
    %v98 = vld [vmem:[#allocation2] sm:$0x1]
    %v100 = vlaneseq
    %v101 = vshrl.u32 %v100, 7
    %v102 = vsub.s32 0, %v101
    %v103 = vrot.slane %v98, %v102
    %v105 = vadd.f32 %v94, %v103
    %v106 = vadd.f32 %v97, %v103
    %v107 = vtanh.pop %v105
    %v108 = vtanh.pop %v106
    %vm109 = vcmask 1024
    %v110 = vsel %vm109, %v107, -inf
    %v111 = vsel %vm109, %v108, -inf
    %v112 = vmax.f32 %v110, %v111
    %v113 = vsub.f32 %v107, %v112
    %v114 = vsub.f32 %v108, %v112
    %v115 = vmul.f32 %v113, 1.442695
    %v116 = vpow.pop %v115
    %v117 = vmul.f32 %v114, 1.442695
    %v118 = vpow.pop %v117
    %v119 = vsel %vm109, %v116, 0.0
    %v120 = vsel %vm109, %v118, 0.0
    %v121 = vadd.f32 %v119, %v120
    %v122 = vrcp.pop %v121
    %v123 = vmul.f32 %v116, %v122
    %v124 = vmul.f32 %v118, %v122
    %126 = vset.pattern.permute.xlu0 0
    %127 = vperm.xlu0 %126, %v123
    %v128 = vpop.permute.xlu0 %127
    %131 = vset.pattern.permute.xlu0 0
    %132 = vperm.xlu0 %131, %v124
    %v133 = vpop.permute.xlu0 %132
    %v135 = vmul.f32 %v80, %v128
    %v136 = vmul.f32 %v81, %v133
    %v137 = vsel %vm91, %v135, 0.0
    %v138 = vsel %vm91, %v136, 0.0
    %v139 = vadd.f32 %v137, %v138
    %v140 = vpack.c.bf16 %v139, %v139
    %v141 = vld [vmem:[%s6] sm:$0xf]
    %v142 = vld [vmem:[%s6 + $0x4] sm:$0xf]
    %v143 = vld [vmem:[%s6 + $0x8] sm:$0xf]
    %v144 = vld [vmem:[%s6 + $0xc] sm:$0xf]
    %v149 = vunpack.c.l.b16 %v141
    %v150 = vunpack.c.l.b16 %v142
    %v151 = vunpack.c.l.b16 %v143
    %v152 = vunpack.c.l.b16 %v144
    %v153 = vpack.c.b16 %v150, %v149
    %v154 = vpack.c.b16 %v152, %v151
    %vm157 = vcmask 261120
    %v159 = vsel %vm157, %v140, 0
    %161 = vmatprep.subr.bf16.mxu0 0
    %162 = vmatpush1.bf16.msra.mxu0 0
    %163 = vmatprep.subr.bf16.mxu0 0
    %164 = vmatpush1.bf16.msra.mxu0 0
    %165 = vmatprep.subr.bf16.mxu0 0
    %166 = vmatpush1.bf16.msra.mxu0 0
    %167 = vmatprep.subr.bf16.mxu0 0
    %168 = vmatpush1.bf16.msra.mxu0 0
    %169 = vmatprep.subr.bf16.mxu0 0
    %170 = vmatpush1.bf16.msra.mxu0 0
    %171 = vmatprep.subr.bf16.mxu0 0
    %172 = vmatpush1.bf16.msra.mxu0 0
    %173 = vmatprep.subr.bf16.mxu0 0
    %174 = vmatpush1.bf16.msra.mxu0 %v154
    %175 = vmatprep.subr.bf16.mxu0 0
    %176 = vmatpush1.bf16.msra.mxu0 %v153
    %177 = vmatprep.subr.bf16.mxu0 0
    %178 = vmatpush2.bf16.msra.mxu0 0
    %179 = vmatprep.subr.bf16.mxu0 0
    %180 = vmatpush2.bf16.msra.mxu0 0
    %181 = vmatprep.subr.bf16.mxu0 0
    %182 = vmatpush2.bf16.msra.mxu0 0
    %183 = vmatprep.subr.bf16.mxu0 0
    %184 = vmatpush2.bf16.msra.mxu0 0
    %185 = vmatprep.subr.bf16.mxu0 0
    %186 = vmatpush2.bf16.msra.mxu0 0
    %187 = vmatprep.subr.bf16.mxu0 0
    %188 = vmatpush2.bf16.msra.mxu0 0
    %189 = vmatprep.subr.bf16.mxu0 0
    %190 = vmatpush2.bf16.msra.mxu0 0
    %191 = vmatprep.subr.bf16.mxu0 0
    %192 = vmatpush2.bf16.msra.mxu0 0
    %193 = vmatprep.mubr.bf16.mxu0 0
    %194 = vmatmul.mubr.bf16.gmra.mxu0 %v159
    %v195 = vpop.f32.mrf.mxu0
    %v196 = vadd.f32 0.0, %v195
    %v197 = vpop.f32.mrf.mxu0
    %v198 = vpop.f32.mrf.mxu0
    %v199 = vpop.f32.mrf.mxu0
    %200 = vdwg.mxu0
    %v201 = vld [vmem:[%s2] sm:$0xff]
    %v202 = vld [vmem:[%s2 + $0x8] sm:$0xff]
    %v203 = vld [vmem:[%s7] sm:$0xf]
    %v204 = vld [vmem:[%s7 + $0x4] sm:$0xf]
    %v205 = vld [vmem:[%s7 + $0x8] sm:$0xf]
    %v206 = vld [vmem:[%s7 + $0xc] sm:$0xf]
    %v207 = vld [vmem:[%s7 + $0x10] sm:$0xf]
    %v208 = vld [vmem:[%s7 + $0x14] sm:$0xf]
    %v209 = vld [vmem:[%s7 + $0x18] sm:$0xf]
    %v210 = vld [vmem:[%s7 + $0x1c] sm:$0xf]
    %v211 = vld [vmem:[%s7 + $0x20] sm:$0xf]
    %v212 = vld [vmem:[%s7 + $0x24] sm:$0xf]
    %v213 = vld [vmem:[%s7 + $0x28] sm:$0xf]
    %v214 = vld [vmem:[%s7 + $0x2c] sm:$0xf]
    %v215 = vld [vmem:[%s7 + $0x30] sm:$0xf]
    %v216 = vld [vmem:[%s7 + $0x34] sm:$0xf]
    %v217 = vld [vmem:[%s7 + $0x38] sm:$0xf]
    %v218 = vld [vmem:[%s7 + $0x3c] sm:$0xf]
    %v219 = vld [vmem:[%s7 + $0x40] sm:$0xf]
    %v220 = vld [vmem:[%s7 + $0x44] sm:$0xf]
    %v221 = vld [vmem:[%s7 + $0x48] sm:$0xf]
    %v222 = vld [vmem:[%s7 + $0x4c] sm:$0xf]
    %v223 = vld [vmem:[%s7 + $0x50] sm:$0xf]
    %v224 = vld [vmem:[%s7 + $0x54] sm:$0xf]
    %v225 = vld [vmem:[%s7 + $0x58] sm:$0xf]
    %v226 = vld [vmem:[%s7 + $0x5c] sm:$0xf]
    %v227 = vld [vmem:[%s7 + $0x60] sm:$0xf]
    %v228 = vld [vmem:[%s7 + $0x64] sm:$0xf]
    %v229 = vld [vmem:[%s7 + $0x68] sm:$0xf]
    %v230 = vld [vmem:[%s7 + $0x6c] sm:$0xf]
    %v231 = vld [vmem:[%s7 + $0x70] sm:$0xf]
    %v232 = vld [vmem:[%s7 + $0x74] sm:$0xf]
    %v233 = vld [vmem:[%s7 + $0x78] sm:$0xf]
    %v234 = vld [vmem:[%s7 + $0x7c] sm:$0xf]
    %v237 = vunpack.c.l.b16 %v201
    %v238 = vunpack.c.h.b16 %v201
    %v239 = vunpack.c.l.b16 %v202
    %v240 = vunpack.c.h.b16 %v202
    %v241 = vpack.c.b16 %v239, %v237
    %v242 = vpack.c.b16 %v240, %v238
    %v277 = vunpack.c.l.b16 %v203
    %v278 = vunpack.c.l.b16 %v204
    %v279 = vunpack.c.l.b16 %v205
    %v280 = vunpack.c.l.b16 %v206
    %v281 = vunpack.c.l.b16 %v207
    %v282 = vunpack.c.l.b16 %v208
    %v283 = vunpack.c.l.b16 %v209
    %v284 = vunpack.c.l.b16 %v210
    %v285 = vunpack.c.l.b16 %v211
    %v286 = vunpack.c.l.b16 %v212
    %v287 = vunpack.c.l.b16 %v213
    %v288 = vunpack.c.l.b16 %v214
    %v289 = vunpack.c.l.b16 %v215
    %v290 = vunpack.c.l.b16 %v216
    %v291 = vunpack.c.l.b16 %v217
    %v292 = vunpack.c.l.b16 %v218
    %v293 = vunpack.c.l.b16 %v219
    %v294 = vunpack.c.l.b16 %v220
    %v295 = vunpack.c.l.b16 %v221
    %v296 = vunpack.c.l.b16 %v222
    %v297 = vunpack.c.l.b16 %v223
    %v298 = vunpack.c.l.b16 %v224
    %v299 = vunpack.c.l.b16 %v225
    %v300 = vunpack.c.l.b16 %v226
    %v301 = vunpack.c.l.b16 %v227
    %v302 = vunpack.c.l.b16 %v228
    %v303 = vunpack.c.l.b16 %v229
    %v304 = vunpack.c.l.b16 %v230
    %v305 = vunpack.c.l.b16 %v231
    %v306 = vunpack.c.l.b16 %v232
    %v307 = vunpack.c.l.b16 %v233
    %v308 = vunpack.c.l.b16 %v234
    %v309 = vpack.c.b16 %v278, %v277
    %v310 = vpack.c.b16 %v280, %v279
    %v311 = vpack.c.b16 %v282, %v281
    %v312 = vpack.c.b16 %v284, %v283
    %v313 = vpack.c.b16 %v286, %v285
    %v314 = vpack.c.b16 %v288, %v287
    %v315 = vpack.c.b16 %v290, %v289
    %v316 = vpack.c.b16 %v292, %v291
    %v317 = vpack.c.b16 %v294, %v293
    %v318 = vpack.c.b16 %v296, %v295
    %v319 = vpack.c.b16 %v298, %v297
    %v320 = vpack.c.b16 %v300, %v299
    %v321 = vpack.c.b16 %v302, %v301
    %v322 = vpack.c.b16 %v304, %v303
    %v323 = vpack.c.b16 %v306, %v305
    %v324 = vpack.c.b16 %v308, %v307
    %341 = vmatprep.subr.bf16.mxu0 0
    %342 = vmatpush1.bf16.msra.mxu0 %v316
    %343 = vmatprep.subr.bf16.mxu0 0
    %344 = vmatpush1.bf16.msra.mxu0 %v315
    %345 = vmatprep.subr.bf16.mxu0 0
    %346 = vmatpush1.bf16.msra.mxu0 %v314
    %347 = vmatprep.subr.bf16.mxu0 0
    %348 = vmatpush1.bf16.msra.mxu0 %v313
    %349 = vmatprep.subr.bf16.mxu0 0
    %350 = vmatpush1.bf16.msra.mxu0 %v312
    %351 = vmatprep.subr.bf16.mxu0 0
    %352 = vmatpush1.bf16.msra.mxu0 %v311
    %353 = vmatprep.subr.bf16.mxu0 0
    %354 = vmatpush1.bf16.msra.mxu0 %v310
    %355 = vmatprep.subr.bf16.mxu0 0
    %356 = vmatpush1.bf16.msra.mxu0 %v309
    %357 = vmatprep.subr.bf16.mxu0 0
    %358 = vmatpush2.bf16.msra.mxu0 %v324
    %359 = vmatprep.subr.bf16.mxu0 0
    %360 = vmatpush2.bf16.msra.mxu0 %v323
    %361 = vmatprep.subr.bf16.mxu0 0
    %362 = vmatpush2.bf16.msra.mxu0 %v322
    %363 = vmatprep.subr.bf16.mxu0 0
    %364 = vmatpush2.bf16.msra.mxu0 %v321
    %365 = vmatprep.subr.bf16.mxu0 0
    %366 = vmatpush2.bf16.msra.mxu0 %v320
    %367 = vmatprep.subr.bf16.mxu0 0
    %368 = vmatpush2.bf16.msra.mxu0 %v319
    %369 = vmatprep.subr.bf16.mxu0 0
    %370 = vmatpush2.bf16.msra.mxu0 %v318
    %371 = vmatprep.subr.bf16.mxu0 0
    %372 = vmatpush2.bf16.msra.mxu0 %v317
    %373 = vmatprep.mubr.bf16.mxu0 %v242
    %374 = vmatmul.mubr.bf16.gmra.mxu0 %v241
    %v375 = vpop.f32.mrf.mxu0
    %v376 = vadd.f32 0.0, %v375
    %v377 = vpop.f32.mrf.mxu0
    %v378 = vpop.f32.mrf.mxu0
    %v379 = vadd.f32 0.0, %v378
    %v380 = vpop.f32.mrf.mxu0
    %381 = vdwg.mxu0
    %v384 = vunpack.c.l.s4 1966171168
    %v385 = vunpack.c.0.s8 %v384
    %v386 = vlaneseq
    %v387 = vshrl.u32 %v386, 7
    %v388 = vsub.s32 %v385, %v387
    %v389 = vrot.slane %v196, %v388
    %v390 = vcombine.high %v389, %v389
    %v392 = vunpack.c.l.s4 1966171168
    %v393 = vunpack.c.0.s8 %v392
    %v394 = vlaneseq
    %v395 = vshrl.u32 %v394, 7
    %v396 = vsub.s32 %v393, %v395
    %v397 = vrot.slane %v389, %v396
    %v399 = vunpack.c.l.s4 1966171168
    %v400 = vunpack.c.0.s8 %v399
    %v401 = vlaneseq
    %v402 = vshrl.u32 %v401, 7
    %v403 = vsub.s32 %v400, %v402
    %v404 = vrot.slane %v390, %v403
    %v405 = vlaneseq
    %v406 = vshrl.u32 %v405, 7
    %v407 = vsub.s32 0, %v406
    %v408 = vrot.slane %v397, %v407
    %v409 = vlaneseq
    %v410 = vshrl.u32 %v409, 7
    %v411 = vsub.s32 0, %v410
    %v412 = vrot.slane %v404, %v411
    %v415 = vadd.f32 %v376, %v408
    %v416 = vadd.f32 %v379, %v412
    %v417 = vld [vmem:[%s8] sm:$0x1]
    %v419 = vlaneseq
    %v420 = vshrl.u32 %v419, 7
    %v421 = vsub.s32 0, %v420
    %v422 = vrot.slane %v417, %v421
    %v424 = vadd.f32 %v415, %v422
    %v425 = vadd.f32 %v416, %v422
    %v426 = vtanh.pop %v424
    %v427 = vtanh.pop %v425
    %v428 = vld [vmem:[%s9] sm:$0x1]
    %v430 = vlaneseq
    %v431 = vshrl.u32 %v430, 7
    %v432 = vsub.s32 0, %v431
    %v433 = vrot.slane %v428, %v432
    %v435 = vmul.f32 %v426, %v433
    %v436 = vmul.f32 %v427, %v433
    %v437 = vsel %vm157, %v435, 0.0
    %438 = vadd.xlane.f32.xlu0 %v437
    %v439 = vpop.xlane.xlu0 %438
    %v440 = vsel %vm157, %v436, 0.0
    %441 = vadd.xlane.f32.xlu0 %v440
    %v442 = vpop.xlane.xlu0 %441
    %445 = vrot.lane.b32.xlu0 %v435, 96
    %v446 = vpop.permute.xlu0 %445
    %447 = vrot.lane.b32.xlu0 %v436, 96
    %v448 = vpop.permute.xlu0 %447
    %v451 = vsel %vm157, %v446, 0.0
    %452 = vadd.xlane.f32.xlu0 %v451
    %v453 = vpop.xlane.xlu0 %452
    %v454 = vsel %vm157, %v448, 0.0
    %455 = vadd.xlane.f32.xlu0 %v454
    %v456 = vpop.xlane.xlu0 %455
    %v457 = vrot.slane %v439, 4
    %v458 = vmax.f32 %v439, %v457
    %v459 = vrot.slane %v458, 2
    %v460 = vmax.f32 %v458, %v459
    %v461 = vrot.slane %v460, 1
    %v462 = vmax.f32 %v460, %v461
    %v463 = vrot.slane %v442, 4
    %v464 = vmax.f32 %v442, %v463
    %v465 = vrot.slane %v464, 2
    %v466 = vmax.f32 %v464, %v465
    %v467 = vrot.slane %v466, 1
    %v468 = vmax.f32 %v466, %v467
    %v469 = vsub.f32 %v439, %v462
    %v470 = vsub.f32 %v442, %v468
    %v471 = vmul.f32 %v469, 1.442695
    %v472 = vpow.pop %v471
    %v473 = vmul.f32 %v470, 1.442695
    %v474 = vpow.pop %v473
    %v475 = vrot.slane %v472, 4
    %v476 = vadd.f32 %v472, %v475
    %v477 = vrot.slane %v476, 2
    %v478 = vadd.f32 %v476, %v477
    %v479 = vrot.slane %v478, 1
    %v480 = vadd.f32 %v478, %v479
    %v481 = vrot.slane %v474, 4
    %v482 = vadd.f32 %v474, %v481
    %v483 = vrot.slane %v482, 2
    %v484 = vadd.f32 %v482, %v483
    %v485 = vrot.slane %v484, 1
    %v486 = vadd.f32 %v484, %v485
    %v487 = vrcp.pop %v480
    %v488 = vrcp.pop %v486
    %v489 = vmul.f32 %v472, %v487
    %v490 = vmul.f32 %v474, %v488
    %v491 = vrot.slane %v453, 4
    %v492 = vmax.f32 %v453, %v491
    %v493 = vrot.slane %v492, 2
    %v494 = vmax.f32 %v492, %v493
    %v495 = vrot.slane %v494, 1
    %v496 = vmax.f32 %v494, %v495
    %v497 = vrot.slane %v456, 4
    %v498 = vmax.f32 %v456, %v497
    %v499 = vrot.slane %v498, 2
    %v500 = vmax.f32 %v498, %v499
    %v501 = vrot.slane %v500, 1
    %v502 = vmax.f32 %v500, %v501
    %v503 = vsub.f32 %v453, %v496
    %v504 = vsub.f32 %v456, %v502
    %v505 = vmul.f32 %v503, 1.442695
    %v506 = vpow.pop %v505
    %v507 = vmul.f32 %v504, 1.442695
    %v508 = vpow.pop %v507
    %v509 = vrot.slane %v506, 4
    %v510 = vadd.f32 %v506, %v509
    %v511 = vrot.slane %v510, 2
    %v512 = vadd.f32 %v510, %v511
    %v513 = vrot.slane %v512, 1
    %v514 = vadd.f32 %v512, %v513
    %v515 = vrot.slane %v508, 4
    %v516 = vadd.f32 %v508, %v515
    %v517 = vrot.slane %v516, 2
    %v518 = vadd.f32 %v516, %v517
    %v519 = vrot.slane %v518, 1
    %v520 = vadd.f32 %v518, %v519
    %v521 = vrcp.pop %v514
    %v522 = vrcp.pop %v520
    %v523 = vmul.f32 %v506, %v521
    %v524 = vmul.f32 %v508, %v522
    %v525 = vlaneseq
    %v526 = vand.u32 %v525, 127
    %v527 = vadd.s32 %v526, 128
    %vm528 = vcmp.lt.s32.totalorder %v526, 128
    %vm529 = vcmp.lt.s32.totalorder %v527, 128
    %v530 = vsel %vm528, %v489, %v523
    %v531 = vsel %vm529, %v489, %v523
    %v532 = vsel %vm528, %v490, %v524
    %v533 = vsel %vm529, %v490, %v524
    %v534 = vld [vmem:[%s3] sm:$0xff]
    %v535 = vld [vmem:[%s3 + $0x8] sm:$0xff]
    %v536 = vunpack.c.l.bf16 %v534
    %v537 = vunpack.c.h.bf16 %v534
    %v538 = vunpack.c.l.bf16 %v535
    %v539 = vunpack.c.h.bf16 %v535
    %v540 = vmul.f32 %v530, %v536
    %v541 = vmul.f32 %v531, %v537
    %v542 = vmul.f32 %v532, %v538
    %v543 = vmul.f32 %v533, %v539
    %v544 = vrot.slane %v540, 4
    %v545 = vadd.f32 %v540, %v544
    %v546 = vrot.slane %v545, 2
    %v547 = vadd.f32 %v545, %v546
    %v548 = vrot.slane %v547, 1
    %v549 = vadd.f32 %v547, %v548
    %v550 = vrot.slane %v541, 4
    %v551 = vadd.f32 %v541, %v550
    %v552 = vrot.slane %v551, 2
    %v553 = vadd.f32 %v551, %v552
    %v554 = vrot.slane %v553, 1
    %v555 = vadd.f32 %v553, %v554
    %v556 = vrot.slane %v542, 4
    %v557 = vadd.f32 %v542, %v556
    %v558 = vrot.slane %v557, 2
    %v559 = vadd.f32 %v557, %v558
    %v560 = vrot.slane %v559, 1
    %v561 = vadd.f32 %v559, %v560
    %v562 = vrot.slane %v543, 4
    %v563 = vadd.f32 %v543, %v562
    %v564 = vrot.slane %v563, 2
    %v565 = vadd.f32 %v563, %v564
    %v566 = vrot.slane %v565, 1
    %v567 = vadd.f32 %v565, %v566
    %v568 = vld [vmem:[%s0] sm:$0x1]
    %v569 = vunpack.c.l.bf16 %v568
    %vm574 = vcmask 1041409
    %v575 = vsel %vm574, %v561, %v549
    %v576 = vsel %vm574, %v567, %v555
    %v579 = vpack.c.bf16 %v569, %v569
    %v580 = vpack.c.bf16 %v575, %v575
    %v581 = vpack.c.bf16 %v576, %v576
    %v582 = vld [vmem:[%s10] sm:$0xf]
    %v583 = vld [vmem:[%s10 + $0x4] sm:$0xf]
    %v584 = vld [vmem:[%s10 + $0x8] sm:$0xf]
    %v585 = vld [vmem:[%s10 + $0xc] sm:$0xf]
    %v586 = vld [vmem:[%s10 + $0x10] sm:$0xf]
    %v587 = vld [vmem:[%s10 + $0x14] sm:$0xf]
    %v588 = vld [vmem:[%s10 + $0x18] sm:$0xf]
    %v589 = vld [vmem:[%s10 + $0x1c] sm:$0xf]
    %v590 = vld [vmem:[%s10 + $0x20] sm:$0xf]
    %v591 = vld [vmem:[%s10 + $0x24] sm:$0xf]
    %v592 = vld [vmem:[%s10 + $0x28] sm:$0xf]
    %v593 = vld [vmem:[%s10 + $0x2c] sm:$0xf]
    %v594 = vld [vmem:[%s10 + $0x30] sm:$0xf]
    %v595 = vld [vmem:[%s10 + $0x34] sm:$0xf]
    %v596 = vld [vmem:[%s10 + $0x38] sm:$0xf]
    %v597 = vld [vmem:[%s10 + $0x3c] sm:$0xf]
    %v598 = vld [vmem:[%s10 + $0x40] sm:$0xf]
    %v599 = vld [vmem:[%s10 + $0x44] sm:$0xf]
    %v600 = vld [vmem:[%s10 + $0x48] sm:$0xf]
    %v601 = vld [vmem:[%s10 + $0x4c] sm:$0xf]
    %v602 = vld [vmem:[%s10 + $0x50] sm:$0xf]
    %v603 = vld [vmem:[%s10 + $0x54] sm:$0xf]
    %v604 = vld [vmem:[%s10 + $0x58] sm:$0xf]
    %v605 = vld [vmem:[%s10 + $0x5c] sm:$0xf]
    %v606 = vld [vmem:[%s10 + $0x60] sm:$0xf]
    %v607 = vld [vmem:[%s10 + $0x64] sm:$0xf]
    %v608 = vld [vmem:[%s10 + $0x68] sm:$0xf]
    %v609 = vld [vmem:[%s10 + $0x6c] sm:$0xf]
    %v610 = vld [vmem:[%s10 + $0x70] sm:$0xf]
    %v611 = vld [vmem:[%s10 + $0x74] sm:$0xf]
    %v612 = vld [vmem:[%s10 + $0x78] sm:$0xf]
    %v613 = vld [vmem:[%s10 + $0x7c] sm:$0xf]
    %v614 = vld [vmem:[%s10 + $0x80] sm:$0xf]
    %v615 = vld [vmem:[%s10 + $0x84] sm:$0xf]
    %v616 = vld [vmem:[%s10 + $0x88] sm:$0xf]
    %v617 = vld [vmem:[%s10 + $0x8c] sm:$0xf]
    %v618 = vld [vmem:[%s10 + $0x90] sm:$0xf]
    %v619 = vld [vmem:[%s10 + $0x94] sm:$0xf]
    %v620 = vld [vmem:[%s10 + $0x98] sm:$0xf]
    %v621 = vld [vmem:[%s10 + $0x9c] sm:$0xf]
    %v622 = vld [vmem:[%s10 + $0xa0] sm:$0xf]
    %v623 = vld [vmem:[%s10 + $0xa4] sm:$0xf]
    %v624 = vld [vmem:[%s10 + $0xa8] sm:$0xf]
    %v625 = vld [vmem:[%s10 + $0xac] sm:$0xf]
    %v626 = vld [vmem:[%s10 + $0xb0] sm:$0xf]
    %v627 = vld [vmem:[%s10 + $0xb4] sm:$0xf]
    %v628 = vld [vmem:[%s10 + $0xb8] sm:$0xf]
    %v629 = vld [vmem:[%s10 + $0xbc] sm:$0xf]
    %v630 = vld [vmem:[%s11] sm:$0x1]
    %v632 = vlaneseq
    %v633 = vshrl.u32 %v632, 7
    %v634 = vsub.s32 0, %v633
    %v635 = vrot.slane %v630, %v634
    %v685 = vunpack.c.l.b16 %v582
    %v686 = vunpack.c.l.b16 %v583
    %v687 = vunpack.c.l.b16 %v584
    %v688 = vunpack.c.l.b16 %v585
    %v689 = vunpack.c.l.b16 %v586
    %v690 = vunpack.c.l.b16 %v587
    %v691 = vunpack.c.l.b16 %v588
    %v692 = vunpack.c.l.b16 %v589
    %v693 = vunpack.c.l.b16 %v590
    %v694 = vunpack.c.l.b16 %v591
    %v695 = vunpack.c.l.b16 %v592
    %v696 = vunpack.c.l.b16 %v593
    %v697 = vunpack.c.l.b16 %v594
    %v698 = vunpack.c.l.b16 %v595
    %v699 = vunpack.c.l.b16 %v596
    %v700 = vunpack.c.l.b16 %v597
    %v701 = vunpack.c.l.b16 %v598
    %v702 = vunpack.c.l.b16 %v599
    %v703 = vunpack.c.l.b16 %v600
    %v704 = vunpack.c.l.b16 %v601
    %v705 = vunpack.c.l.b16 %v602
    %v706 = vunpack.c.l.b16 %v603
    %v707 = vunpack.c.l.b16 %v604
    %v708 = vunpack.c.l.b16 %v605
    %v709 = vunpack.c.l.b16 %v606
    %v710 = vunpack.c.l.b16 %v607
    %v711 = vunpack.c.l.b16 %v608
    %v712 = vunpack.c.l.b16 %v609
    %v713 = vunpack.c.l.b16 %v610
    %v714 = vunpack.c.l.b16 %v611
    %v715 = vunpack.c.l.b16 %v612
    %v716 = vunpack.c.l.b16 %v613
    %v717 = vunpack.c.l.b16 %v614
    %v718 = vunpack.c.l.b16 %v615
    %v719 = vunpack.c.l.b16 %v616
    %v720 = vunpack.c.l.b16 %v617
    %v721 = vunpack.c.l.b16 %v618
    %v722 = vunpack.c.l.b16 %v619
    %v723 = vunpack.c.l.b16 %v620
    %v724 = vunpack.c.l.b16 %v621
    %v725 = vunpack.c.l.b16 %v622
    %v726 = vunpack.c.l.b16 %v623
    %v727 = vunpack.c.l.b16 %v624
    %v728 = vunpack.c.l.b16 %v625
    %v729 = vunpack.c.l.b16 %v626
    %v730 = vunpack.c.l.b16 %v627
    %v731 = vunpack.c.l.b16 %v628
    %v732 = vunpack.c.l.b16 %v629
    %v733 = vpack.c.b16 %v686, %v685
    %v734 = vpack.c.b16 %v688, %v687
    %v735 = vpack.c.b16 %v690, %v689
    %v736 = vpack.c.b16 %v692, %v691
    %v737 = vpack.c.b16 %v694, %v693
    %v738 = vpack.c.b16 %v696, %v695
    %v739 = vpack.c.b16 %v698, %v697
    %v740 = vpack.c.b16 %v700, %v699
    %v741 = vpack.c.b16 %v702, %v701
    %v742 = vpack.c.b16 %v704, %v703
    %v743 = vpack.c.b16 %v706, %v705
    %v744 = vpack.c.b16 %v708, %v707
    %v745 = vpack.c.b16 %v710, %v709
    %v746 = vpack.c.b16 %v712, %v711
    %v747 = vpack.c.b16 %v714, %v713
    %v748 = vpack.c.b16 %v716, %v715
    %v749 = vpack.c.b16 %v718, %v717
    %v750 = vpack.c.b16 %v720, %v719
    %v751 = vpack.c.b16 %v722, %v721
    %v752 = vpack.c.b16 %v724, %v723
    %v753 = vpack.c.b16 %v726, %v725
    %v754 = vpack.c.b16 %v728, %v727
    %v755 = vpack.c.b16 %v730, %v729
    %v756 = vpack.c.b16 %v732, %v731
    %781 = vmatprep.subr.bf16.mxu0 0
    %782 = vmatpush1.bf16.msra.mxu0 %v740
    %783 = vmatprep.subr.bf16.mxu0 0
    %784 = vmatpush1.bf16.msra.mxu0 %v739
    %785 = vmatprep.subr.bf16.mxu0 0
    %786 = vmatpush1.bf16.msra.mxu0 %v738
    %787 = vmatprep.subr.bf16.mxu0 0
    %788 = vmatpush1.bf16.msra.mxu0 %v737
    %789 = vmatprep.subr.bf16.mxu0 0
    %790 = vmatpush1.bf16.msra.mxu0 %v736
    %791 = vmatprep.subr.bf16.mxu0 0
    %792 = vmatpush1.bf16.msra.mxu0 %v735
    %793 = vmatprep.subr.bf16.mxu0 0
    %794 = vmatpush1.bf16.msra.mxu0 %v734
    %795 = vmatprep.subr.bf16.mxu0 0
    %796 = vmatpush1.bf16.msra.mxu0 %v733
    %797 = vmatprep.subr.bf16.mxu0 0
    %798 = vmatpush2.bf16.msra.mxu0 %v748
    %799 = vmatprep.subr.bf16.mxu0 0
    %800 = vmatpush2.bf16.msra.mxu0 %v747
    %801 = vmatprep.subr.bf16.mxu0 0
    %802 = vmatpush2.bf16.msra.mxu0 %v746
    %803 = vmatprep.subr.bf16.mxu0 0
    %804 = vmatpush2.bf16.msra.mxu0 %v745
    %805 = vmatprep.subr.bf16.mxu0 0
    %806 = vmatpush2.bf16.msra.mxu0 %v744
    %807 = vmatprep.subr.bf16.mxu0 0
    %808 = vmatpush2.bf16.msra.mxu0 %v743
    %809 = vmatprep.subr.bf16.mxu0 0
    %810 = vmatpush2.bf16.msra.mxu0 %v742
    %811 = vmatprep.subr.bf16.mxu0 0
    %812 = vmatpush2.bf16.msra.mxu0 %v741
    %813 = vmatprep.mubr.bf16.mxu0 %v580
    %814 = vmatmul.mubr.bf16.gmra.mxu0 %v579
    %v815 = vpop.f32.mrf.mxu0
    %v816 = vadd.f32 %v635, %v815
    %v817 = vpop.f32.mrf.mxu0
    %v818 = vpop.f32.mrf.mxu0
    %v819 = vpop.f32.mrf.mxu0
    %820 = vdwg.mxu0
    %821 = vmatprep.subr.bf16.mxu0 0
    %822 = vmatpush1.bf16.msra.mxu0 %v756
    %823 = vmatprep.subr.bf16.mxu0 0
    %824 = vmatpush1.bf16.msra.mxu0 %v755
    %825 = vmatprep.subr.bf16.mxu0 0
    %826 = vmatpush1.bf16.msra.mxu0 %v754
    %827 = vmatprep.subr.bf16.mxu0 0
    %828 = vmatpush1.bf16.msra.mxu0 %v753
    %829 = vmatprep.subr.bf16.mxu0 0
    %830 = vmatpush1.bf16.msra.mxu0 %v752
    %831 = vmatprep.subr.bf16.mxu0 0
    %832 = vmatpush1.bf16.msra.mxu0 %v751
    %833 = vmatprep.subr.bf16.mxu0 0
    %834 = vmatpush1.bf16.msra.mxu0 %v750
    %835 = vmatprep.subr.bf16.mxu0 0
    %836 = vmatpush1.bf16.msra.mxu0 %v749
    %837 = vmatprep.subr.bf16.mxu0 0
    %838 = vmatpush2.bf16.msra.mxu0 0
    %839 = vmatprep.subr.bf16.mxu0 0
    %840 = vmatpush2.bf16.msra.mxu0 0
    %841 = vmatprep.subr.bf16.mxu0 0
    %842 = vmatpush2.bf16.msra.mxu0 0
    %843 = vmatprep.subr.bf16.mxu0 0
    %844 = vmatpush2.bf16.msra.mxu0 0
    %845 = vmatprep.subr.bf16.mxu0 0
    %846 = vmatpush2.bf16.msra.mxu0 0
    %847 = vmatprep.subr.bf16.mxu0 0
    %848 = vmatpush2.bf16.msra.mxu0 0
    %849 = vmatprep.subr.bf16.mxu0 0
    %850 = vmatpush2.bf16.msra.mxu0 0
    %851 = vmatprep.subr.bf16.mxu0 0
    %852 = vmatpush2.bf16.msra.mxu0 0
    %853 = vmatprep.mubr.bf16.mxu0 0
    %854 = vmatmul.mubr.bf16.gmra.mxu0 %v581
    %v855 = vpop.f32.mrf.mxu0
    %v856 = vadd.f32 %v816, %v855
    %v857 = vpop.f32.mrf.mxu0
    %v858 = vpop.f32.mrf.mxu0
    %v859 = vpop.f32.mrf.mxu0
    %860 = vdwg.mxu0
    %v861 = vld [vmem:[%s12] sm:$0x1]
    %v862 = vld [vmem:[%s12 + $0x1] sm:$0x1]
    %v863 = vld [vmem:[%s12 + $0x2] sm:$0x1]
    %v865 = vlaneseq
    %v866 = vshrl.u32 %v865, 7
    %v867 = vsub.s32 0, %v866
    %v868 = vrot.slane %v861, %v867
    %v870 = vmul.f32 %v868, %v81
    %v871 = vadd.f32 %v856, %v870
    %v872 = vxor.u32 %v871, 2147483648
    %v873 = vmul.f32 %v872, 1.442695
    %v874 = vpow.pop %v873
    %v875 = vadd.f32 %v874, 1.0
    %v876 = vrcp.pop %v875
    %v877 = vmul.f32 1.0, %v876
    %v879 = vlaneseq
    %v880 = vshrl.u32 %v879, 7
    %v881 = vsub.s32 0, %v880
    %v882 = vrot.slane %v862, %v881
    %v884 = vmul.f32 %v882, %v81
    %886 = vrot.lane.b32.xlu0 %v884, 32
    %v887 = vpop.permute.xlu0 %886
    %v889 = vadd.f32 %v856, %v887
    %v890 = vxor.u32 %v889, 2147483648
    %v891 = vmul.f32 %v890, 1.442695
    %v892 = vpow.pop %v891
    %v893 = vadd.f32 %v892, 1.0
    %v894 = vrcp.pop %v893
    %v895 = vmul.f32 1.0, %v894
    %v897 = vlaneseq
    %v898 = vshrl.u32 %v897, 7
    %v899 = vsub.s32 0, %v898
    %v900 = vrot.slane %v863, %v899
    %v902 = vmul.f32 %v900, %v81
    %v903 = vmul.f32 %v877, %v902
    %905 = vrot.lane.b32.xlu0 %v903, 64
    %v906 = vpop.permute.xlu0 %905
    %v908 = vadd.f32 %v856, %v906
    %v909 = vtanh.pop %v908
    %v910 = vsub.f32 1.0, %v895
    %912 = vrot.lane.b32.xlu0 %v909, 96
    %v913 = vpop.permute.xlu0 %912
    %v915 = vmul.f32 %v910, %v913
    %917 = vrot.lane.b32.xlu0 %v81, 32
    %v918 = vpop.permute.xlu0 %917
    %v920 = vmul.f32 %v895, %v918
    %v921 = vadd.f32 %v915, %v920
    %v922 = vpack.c.bf16 %v921, %v921
    %v923 = vld [vmem:[%s13] sm:$0xf]
    %v924 = vld [vmem:[%s13 + $0x4] sm:$0xf]
    %v925 = vld [vmem:[%s13 + $0x8] sm:$0xf]
    %v926 = vld [vmem:[%s13 + $0xc] sm:$0xf]
    %v927 = vld [vmem:[%s14] sm:$0x1]
    %v929 = vlaneseq
    %v930 = vshrl.u32 %v929, 7
    %v931 = vsub.s32 0, %v930
    %v932 = vrot.slane %v927, %v931
    %935 = vrot.lane.b32.xlu0 %v922, 96
    %v936 = vpop.permute.xlu0 %935
    %v941 = vunpack.c.l.b16 %v923
    %v942 = vunpack.c.l.b16 %v924
    %v943 = vunpack.c.l.b16 %v925
    %v944 = vunpack.c.l.b16 %v926
    %v945 = vpack.c.b16 %v942, %v941
    %v946 = vpack.c.b16 %v944, %v943
    %v950 = vsel %vm157, %v936, 0
    %952 = vmatprep.subr.bf16.mxu0 0
    %953 = vmatpush1.bf16.msra.mxu0 0
    %954 = vmatprep.subr.bf16.mxu0 0
    %955 = vmatpush1.bf16.msra.mxu0 0
    %956 = vmatprep.subr.bf16.mxu0 0
    %957 = vmatpush1.bf16.msra.mxu0 0
    %958 = vmatprep.subr.bf16.mxu0 0
    %959 = vmatpush1.bf16.msra.mxu0 0
    %960 = vmatprep.subr.bf16.mxu0 0
    %961 = vmatpush1.bf16.msra.mxu0 0
    %962 = vmatprep.subr.bf16.mxu0 0
    %963 = vmatpush1.bf16.msra.mxu0 0
    %964 = vmatprep.subr.bf16.mxu0 0
    %965 = vmatpush1.bf16.msra.mxu0 %v946
    %966 = vmatprep.subr.bf16.mxu0 0
    %967 = vmatpush1.bf16.msra.mxu0 %v945
    %968 = vmatprep.subr.bf16.mxu0 0
    %969 = vmatpush2.bf16.msra.mxu0 0
    %970 = vmatprep.subr.bf16.mxu0 0
    %971 = vmatpush2.bf16.msra.mxu0 0
    %972 = vmatprep.subr.bf16.mxu0 0
    %973 = vmatpush2.bf16.msra.mxu0 0
    %974 = vmatprep.subr.bf16.mxu0 0
    %975 = vmatpush2.bf16.msra.mxu0 0
    %976 = vmatprep.subr.bf16.mxu0 0
    %977 = vmatpush2.bf16.msra.mxu0 0
    %978 = vmatprep.subr.bf16.mxu0 0
    %979 = vmatpush2.bf16.msra.mxu0 0
    %980 = vmatprep.subr.bf16.mxu0 0
    %981 = vmatpush2.bf16.msra.mxu0 0
    %982 = vmatprep.subr.bf16.mxu0 0
    %983 = vmatpush2.bf16.msra.mxu0 0
    %984 = vmatprep.mubr.bf16.mxu0 0
    %985 = vmatmul.mubr.bf16.gmra.mxu0 %v950
    %v986 = vpop.f32.mrf.mxu0
    %v987 = vadd.f32 %v932, %v986
    %v988 = vpop.f32.mrf.mxu0
    %v989 = vpop.f32.mrf.mxu0
    %v990 = vpop.f32.mrf.mxu0
    %991 = vdwg.mxu0
    %v992 = vld [vmem:[%s15] sm:$0x1]
    %v993 = vld [vmem:[%s15 + $0x1] sm:$0x1]
    %v994 = vld [vmem:[%s15 + $0x2] sm:$0x1]
    %v996 = vlaneseq
    %v997 = vshrl.u32 %v996, 7
    %v998 = vsub.s32 0, %v997
    %v999 = vrot.slane %v992, %v998
    %v1001 = vmul.f32 %v999, %v80
    %v1002 = vadd.f32 %v987, %v1001
    %v1003 = vxor.u32 %v1002, 2147483648
    %v1004 = vmul.f32 %v1003, 1.442695
    %v1005 = vpow.pop %v1004
    %v1006 = vadd.f32 %v1005, 1.0
    %v1007 = vrcp.pop %v1006
    %v1008 = vmul.f32 1.0, %v1007
    %v1010 = vlaneseq
    %v1011 = vshrl.u32 %v1010, 7
    %v1012 = vsub.s32 0, %v1011
    %v1013 = vrot.slane %v993, %v1012
    %v1015 = vmul.f32 %v1013, %v80
    %1017 = vrot.lane.b32.xlu0 %v1015, 32
    %v1018 = vpop.permute.xlu0 %1017
    %v1020 = vadd.f32 %v987, %v1018
    %v1021 = vxor.u32 %v1020, 2147483648
    %v1022 = vmul.f32 %v1021, 1.442695
    %v1023 = vpow.pop %v1022
    %v1024 = vadd.f32 %v1023, 1.0
    %v1025 = vrcp.pop %v1024
    %v1026 = vmul.f32 1.0, %v1025
    %v1028 = vlaneseq
    %v1029 = vshrl.u32 %v1028, 7
    %v1030 = vsub.s32 0, %v1029
    %v1031 = vrot.slane %v994, %v1030
    %v1033 = vmul.f32 %v1031, %v80
    %v1034 = vmul.f32 %v1008, %v1033
    %1036 = vrot.lane.b32.xlu0 %v1034, 64
    %v1037 = vpop.permute.xlu0 %1036
    %v1039 = vadd.f32 %v987, %v1037
    %v1040 = vtanh.pop %v1039
    %v1041 = vsub.f32 1.0, %v1026
    %1043 = vrot.lane.b32.xlu0 %v1040, 96
    %v1044 = vpop.permute.xlu0 %1043
    %v1046 = vmul.f32 %v1041, %v1044
    %1048 = vrot.lane.b32.xlu0 %v80, 32
    %v1049 = vpop.permute.xlu0 %1048
    %v1051 = vmul.f32 %v1026, %v1049
    %v1052 = vadd.f32 %v1046, %v1051
    %1055 = vrot.lane.b32.xlu0 %v921, 96
    %v1056 = vpop.permute.xlu0 %1055
    %1057 = vrot.lane.b32.xlu0 %v1052, 96
    %v1058 = vpop.permute.xlu0 %1057
    %1061 = vst.msk [vmem:[#allocation7] sm:$0x3] %vm91, %v1056
    %1062 = vst.msk [vmem:[#allocation7 + $0x2] sm:$0x3] %vm91, %v1058
    %v1063 = vpack.c.bf16 %v1052, %v1052
    %v1064 = vld [vmem:[%s16] sm:$0xf]
    %v1065 = vld [vmem:[%s16 + $0x4] sm:$0xf]
    %v1066 = vld [vmem:[%s16 + $0x8] sm:$0xf]
    %v1067 = vld [vmem:[%s16 + $0xc] sm:$0xf]
    %v1068 = vld [vmem:[%s17] sm:$0x1]
    %v1070 = vlaneseq
    %v1071 = vshrl.u32 %v1070, 7
    %v1072 = vsub.s32 0, %v1071
    %v1073 = vrot.slane %v1068, %v1072
    %1076 = vrot.lane.b32.xlu0 %v1063, 96
    %v1077 = vpop.permute.xlu0 %1076
    %v1082 = vunpack.c.l.b16 %v1064
    %v1083 = vunpack.c.l.b16 %v1065
    %v1084 = vunpack.c.l.b16 %v1066
    %v1085 = vunpack.c.l.b16 %v1067
    %v1086 = vpack.c.b16 %v1083, %v1082
    %v1087 = vpack.c.b16 %v1085, %v1084
    %v1091 = vsel %vm157, %v1077, 0
    %1093 = vmatprep.subr.bf16.mxu0 0
    %1094 = vmatpush1.bf16.msra.mxu0 0
    %1095 = vmatprep.subr.bf16.mxu0 0
    %1096 = vmatpush1.bf16.msra.mxu0 0
    %1097 = vmatprep.subr.bf16.mxu0 0
    %1098 = vmatpush1.bf16.msra.mxu0 0
    %1099 = vmatprep.subr.bf16.mxu0 0
    %1100 = vmatpush1.bf16.msra.mxu0 0
    %1101 = vmatprep.subr.bf16.mxu0 0
    %1102 = vmatpush1.bf16.msra.mxu0 0
    %1103 = vmatprep.subr.bf16.mxu0 0
    %1104 = vmatpush1.bf16.msra.mxu0 0
    %1105 = vmatprep.subr.bf16.mxu0 0
    %1106 = vmatpush1.bf16.msra.mxu0 %v1087
    %1107 = vmatprep.subr.bf16.mxu0 0
    %1108 = vmatpush1.bf16.msra.mxu0 %v1086
    %1109 = vmatprep.subr.bf16.mxu0 0
    %1110 = vmatpush2.bf16.msra.mxu0 0
    %1111 = vmatprep.subr.bf16.mxu0 0
    %1112 = vmatpush2.bf16.msra.mxu0 0
    %1113 = vmatprep.subr.bf16.mxu0 0
    %1114 = vmatpush2.bf16.msra.mxu0 0
    %1115 = vmatprep.subr.bf16.mxu0 0
    %1116 = vmatpush2.bf16.msra.mxu0 0
    %1117 = vmatprep.subr.bf16.mxu0 0
    %1118 = vmatpush2.bf16.msra.mxu0 0
    %1119 = vmatprep.subr.bf16.mxu0 0
    %1120 = vmatpush2.bf16.msra.mxu0 0
    %1121 = vmatprep.subr.bf16.mxu0 0
    %1122 = vmatpush2.bf16.msra.mxu0 0
    %1123 = vmatprep.subr.bf16.mxu0 0
    %1124 = vmatpush2.bf16.msra.mxu0 0
    %1125 = vmatprep.mubr.bf16.mxu0 0
    %1126 = vmatmul.mubr.bf16.gmra.mxu0 %v1091
    %v1127 = vpop.f32.mrf.mxu0
    %v1128 = vadd.f32 %v1073, %v1127
    %v1129 = vpop.f32.mrf.mxu0
    %v1130 = vpop.f32.mrf.mxu0
    %v1131 = vpop.f32.mrf.mxu0
    %1132 = vdwg.mxu0
    %vm1133 = vcmask 517120
    %v1134 = vsel %vm1133, %v1128, -inf
    %1135 = vmax.xlane.f32.xlu0 %v1134
    %v1136 = vpop.xlane.xlu0 %1135
    %v1137 = vsub.f32 %v1128, %v1136
    %v1138 = vmul.f32 %v1137, 1.442695
    %v1139 = vpow.pop %v1138
    %v1140 = vsel %vm1133, %v1139, 0.0
    %1141 = vadd.xlane.f32.xlu0 %v1140
    %v1142 = vpop.xlane.xlu0 %1141
    %v1143 = vlog2.pop %v1142
    %v1144 = vmul.f32 %v1143, 0.6931472
    %v1145 = vsub.f32 %v1137, %v1144
    %1146 = vst.msk [vmem:[#allocation6] sm:$0x3] %vm1133, %v1145
    // Predicated region
    $region78: #{tpu_custom_call.1} parent=1 // pred_check
      _
    $region79: #{tpu_custom_call.1} parent=1 // pred_check_branch
      %1148 = sbr.rel (0) target = $region81
    $region80: #{tpu_custom_call.1} parent=1 // pred_region
      %s1150 = ssub.s32 32, 32
      %1151 = vsyncadd [#allocation5], %s1150
      %s1153 = sshll.u32 [#allocation6], 4
      %s1154 = int_to_ptr.vmem [resolvable:$true] %s1153
      %1156 = dma.vmem_to_hbm [thread:$0]  %s1154, 32, %s18, [#allocation5]
    $region81: #{tpu_custom_call.1} parent=1 // pred_fallthru
      _
    // Predicated region
    $region82: #{tpu_custom_call.1} parent=1 // pred_check
      _
    $region83: #{tpu_custom_call.1} parent=1 // pred_check_branch
      %1158 = sbr.rel (0) target = $region85
    $region84: #{tpu_custom_call.1} parent=1 // pred_region
      %s1160 = ssub.s32 64, 64
      %1161 = vsyncadd [#allocation8], %s1160
      %s1162 = sshll.u32 [#allocation7], 4
      %s1163 = int_to_ptr.vmem [resolvable:$true] %s1162
      %1168 = dma.vmem_to_hbm [thread:$0]  %s1163, 64, %s19, [#allocation8], 32, 32, 2
    $region85: #{tpu_custom_call.1} parent=1 // pred_fallthru
      _
    // Predicated region
    $region86: #{tpu_custom_call.1} parent=1 // pred_check
      _
    $region87: #{tpu_custom_call.1} parent=1 // pred_check_branch
      %1170 = sbr.rel (0) target = $region89
    $region88: #{tpu_custom_call.1} parent=1 // pred_region
      %1171 = dma.done [#allocation5], 32
    $region89: #{tpu_custom_call.1} parent=1 // pred_fallthru
      _
    // Predicated region
    $region90: #{tpu_custom_call.1} parent=1 // pred_check
      _
    $region91: #{tpu_custom_call.1} parent=1 // pred_check_branch
      %1173 = sbr.rel (0) target = $region93
    $region92: #{tpu_custom_call.1} parent=1 // pred_region
      %1174 = dma.done [#allocation8], 64
    $region93: #{tpu_custom_call.1} parent=1 // pred_fallthru
      _
    %1175 = vsyncpa [#allocation4], 1
    %1176 = vsyncpa [#allocation5], 1
    %1177 = vsyncpa [#allocation8], 1

</llo_original>
